<compile_context>
chip_gen: v5e
topology: v5e:2x2
jax: 0.10.0
libtpu: 0.0.40
codegen_flags: <defaults>
</compile_context>

<pallas_src>
import functools

import jax
import jax.numpy as jnp
from jax.experimental import pallas as pl
from jax.experimental.pallas import tpu as pltpu


def _laplacian_kernel(logits_ref, targets_ref, out_ref, *, apply_sigmoid):
    """One row-tile of L = D - A for activated logits and for targets.

    Mirrors the (mis)naming of the torch code:
      out[0] = L_true = laplacian(activate(logits))
      out[1] = L_pred = laplacian(targets)
    """
    a = logits_ref[...].astype(jnp.float32)
    if apply_sigmoid:
        # sigmoid(x) == 0.5*(tanh(x/2)+1): one EUP transcendental per element
        # instead of exp + full-precision divide (matters on v5e's single EUP).
        a = 0.5 * (jnp.tanh(0.5 * a) + 1.0)
    t = targets_ref[...].astype(jnp.float32)

    tm, n = a.shape
    # Diagonal test for this row-tile: global row = program_id(0)*TM + local row.
    row = jax.lax.broadcasted_iota(jnp.int32, (tm, n), 0) + pl.program_id(0) * tm
    col = jax.lax.broadcasted_iota(jnp.int32, (tm, n), 1)
    eq = row == col

    # D = diag(sum(A, dim=1));  L[i,j] = (i==j) ? rowsum_i - A[i,j] : -A[i,j]
    rs_a = jnp.sum(a, axis=1, keepdims=True)  # [TM, 1] lane-reduce (XLU slot)
    rs_t = jnp.sum(t, axis=1, keepdims=True)  # [TM, 1]

    out_ref[0] = jnp.where(eq, rs_a - a, -a)
    out_ref[1] = jnp.where(eq, rs_t - t, -t)


def _vmem_budgets():
    """(tile_budget_bytes, vmem_limit_bytes) derived from the chip's VMEM."""
    try:
        vmem_cap = pltpu.get_tpu_info().vmem_capacity_bytes
    except Exception:  # not a TPU / API unavailable: assume v7x-sized VMEM
        vmem_cap = 64 * 1024 * 1024
    vmem_limit = (vmem_cap * 3) // 4          # explicit scoped-VMEM limit
    tile_budget = vmem_limit // 2             # double-buffered tiles <= half of it
    return int(tile_budget), int(vmem_limit)


def _pick_row_tile(n, tile_budget):
    """Row tile TM: multiple of 8, fits the VMEM budget, >= 2 grid steps for
    N >= 16 (so both v7x TensorCores get work). Does NOT need to divide N."""
    if n < 16:
        return n  # single full block (block_shape == array dims is always legal)
    # Per-step footprint: 2 inputs + 1 (2,TM,N) output, each double-buffered,
    # f32  ->  ~32 bytes per (row, col) element of the tile.
    budget_rows = max(8, tile_budget // (32 * n))
    half = max(8, ((n // 2) // 8) * 8)        # force >= 2 grid steps
    cap = min(n, 1024, budget_rows, half)
    return max(8, (cap // 8) * 8)


def laplacian_eigenmaps_loss(logits, targets, *, sigmoid=True):
    """JAX/Pallas port of LaplacianEigenmapsLoss.forward
    (diagonal=False, reduction='mean' defaults)."""
    assert logits.ndim == 2 and logits.shape[0] == logits.shape[1]
    assert logits.shape == targets.shape
    n = logits.shape[0]

    tile_budget, vmem_limit = _vmem_budgets()
    tm = _pick_row_tile(n, tile_budget)
    grid = (pl.cdiv(n, tm),)

    cost = pl.CostEstimate(
        flops=8 * n * n,            # row-sums, subtracts, selects, sigmoid muls
        transcendentals=n * n,      # one tanh per element
        bytes_accessed=16 * n * n,  # read 2 f32 NxN, write 2 f32 NxN
    )

    # ---- Pallas kernel: sigmoid + row-sum + Laplacian for both inputs ----
    # Row-tiled: each grid step handles (TM, N) rows of both matrices and writes
    # the matching rows of both Laplacians into one [2, N, N] slab.
    laplacians = pl.pallas_call(
        functools.partial(_laplacian_kernel, apply_sigmoid=sigmoid),
        out_shape=jax.ShapeDtypeStruct((2, n, n), jnp.float32),
        grid=grid,
        in_specs=[
            pl.BlockSpec((tm, n), lambda i: (i, 0)),
            pl.BlockSpec((tm, n), lambda i: (i, 0)),
        ],
        out_specs=pl.BlockSpec((2, tm, n), lambda i: (0, i, 0)),
        compiler_params=pltpu.CompilerParams(
            dimension_semantics=("parallel",),
            vmem_limit_bytes=vmem_limit,
        ),
        cost_estimate=cost,
    )(logits, targets)

    # TODO(synk): symmetric eigendecomposition (torch.linalg.eigh) has no Pallas
    # primitive; done as a single batched jnp.linalg.eigh over [2, N, N] here
    # (it dominates end-to-end time anyway).
    _, evecs = jnp.linalg.eigh(laplacians)
    v_true = evecs[0, :, 1]  # second (first non-trivial) eigenvector of L_true
    v_pred = evecs[1, :, 1]  # second eigenvector of L_pred

    # MSE ('mean') between the two Fiedler vectors — tiny, leave to XLA fusion.
    # NOTE: like the torch reference, this is not sign-invariant w.r.t. eigh's
    # arbitrary eigenvector sign; kept as-is to match the module's semantics.
    d = v_true.astype(jnp.float32) - v_pred.astype(jnp.float32)
    return jnp.mean(d * d)


if __name__ == "__main__":
    key = jax.random.PRNGKey(0)
    k1, k2 = jax.random.split(key)

    N = 64  # small square adjacency matrix
    logits = jax.random.normal(k1, (N, N), dtype=jnp.float32)
    # symmetrize (adjacency-like) so eigh sees a symmetric Laplacian
    logits = 0.5 * (logits + logits.T)
    targets = jax.random.uniform(k2, (N, N), dtype=jnp.float32)
    targets = 0.5 * (targets + targets.T)

    loss = jax.jit(laplacian_eigenmaps_loss)(logits, targets)
    jax.block_until_ready(loss)

    assert loss.shape == () and jnp.isfinite(loss)
    print("KERNEL_OK")
</pallas_src>

<mosaic_0001>
module attributes {stable_mosaic.version = 11 : i64} {
  func.func @_laplacian_kernel(%arg0: i32, %arg1: memref<32x64xf32, #tpu.memory_space<vmem>>, %arg2: memref<32x64xf32, #tpu.memory_space<vmem>>, %arg3: memref<2x32x64xf32, #tpu.memory_space<vmem>>) attributes {dimension_semantics = [#tpu.dimension_semantics<parallel>], iteration_bounds = array<i64: 2>, scalar_prefetch = 0 : i64, scratch_operands = 0 : i64, tpu.core_type = #tpu.core_type<tc>, window_params = [{transform_indices = @transform_0, window_bounds = array<i64: 32, 64>}, {transform_indices = @transform_1, window_bounds = array<i64: 32, 64>}, {transform_indices = @transform_2, window_bounds = array<i64: 2, 32, 64>}]} {
    %c0 = arith.constant 0 : index
    %c0_0 = arith.constant 0 : index
    %0 = vector.load %arg1[%c0, %c0_0] : memref<32x64xf32, #tpu.memory_space<vmem>>, vector<32x64xf32>
    %cst = arith.constant 5.000000e-01 : f32
    %1 = vector.broadcast %cst : f32 to vector<32x64xf32>
    %2 = arith.mulf %1, %0 : vector<32x64xf32>
    %3 = math.tanh %2 : vector<32x64xf32>
    %cst_1 = arith.constant 1.000000e+00 : f32
    %4 = vector.broadcast %cst_1 : f32 to vector<32x64xf32>
    %5 = arith.addf %3, %4 : vector<32x64xf32>
    %cst_2 = arith.constant 5.000000e-01 : f32
    %6 = vector.broadcast %cst_2 : f32 to vector<32x64xf32>
    %7 = arith.mulf %6, %5 : vector<32x64xf32>
    %c0_3 = arith.constant 0 : index
    %c0_4 = arith.constant 0 : index
    %8 = vector.load %arg2[%c0_3, %c0_4] : memref<32x64xf32, #tpu.memory_space<vmem>>, vector<32x64xf32>
    %9 = tpu.iota {dimensions = array<i32: 0>} : vector<32x64xi32>
    %c32_i32 = arith.constant 32 : i32
    %10 = arith.muli %arg0, %c32_i32 : i32
    %11 = vector.broadcast %10 : i32 to vector<32x64xi32>
    %12 = arith.addi %9, %11 : vector<32x64xi32>
    %13 = tpu.iota {dimensions = array<i32: 1>} : vector<32x64xi32>
    %14 = arith.cmpi eq, %12, %13 : vector<32x64xi32>
    %cst_5 = arith.constant dense<0.000000e+00> : vector<32xf32>
    %15 = vector.multi_reduction <add>, %7, %cst_5 [1] : vector<32x64xf32> to vector<32xf32>
    %16 = vector.shape_cast %15 : vector<32xf32> to vector<32x1xf32>
    %cst_6 = arith.constant dense<0.000000e+00> : vector<32xf32>
    %17 = vector.multi_reduction <add>, %8, %cst_6 [1] : vector<32x64xf32> to vector<32xf32>
    %18 = vector.shape_cast %17 : vector<32xf32> to vector<32x1xf32>
    %19 = vector.broadcast %16 : vector<32x1xf32> to vector<32x64xf32>
    %20 = arith.subf %19, %7 : vector<32x64xf32>
    %cst_7 = arith.constant 0.000000e+00 : f32
    %21 = vector.broadcast %cst_7 : f32 to vector<32x64xf32>
    %22 = arith.subf %21, %7 : vector<32x64xf32>
    %23 = arith.select %14, %20, %22 : vector<32x64xi1>, vector<32x64xf32>
    %c0_8 = arith.constant 0 : index
    %c0_9 = arith.constant 0 : index
    %c0_10 = arith.constant 0 : index
    %24 = vector.load %arg3[%c0_8, %c0_9, %c0_10] : memref<2x32x64xf32, #tpu.memory_space<vmem>>, vector<1x32x64xf32>
    %25 = vector.shape_cast %24 : vector<1x32x64xf32> to vector<32x64xf32>
    %26 = vector.shape_cast %23 : vector<32x64xf32> to vector<1x32x64xf32>
    tpu.vector_store %arg3[%c0_8, %c0_9, %c0_10], %26 {strides = array<i32>} : memref<2x32x64xf32, #tpu.memory_space<vmem>>, vector<1x32x64xf32>,
    %27 = vector.broadcast %18 : vector<32x1xf32> to vector<32x64xf32>
    %28 = arith.subf %27, %8 : vector<32x64xf32>
    %cst_11 = arith.constant 0.000000e+00 : f32
    %29 = vector.broadcast %cst_11 : f32 to vector<32x64xf32>
    %30 = arith.subf %29, %8 : vector<32x64xf32>
    %31 = arith.select %14, %28, %30 : vector<32x64xi1>, vector<32x64xf32>
    %c1 = arith.constant 1 : index
    %c0_12 = arith.constant 0 : index
    %c0_13 = arith.constant 0 : index
    %32 = vector.load %arg3[%c1, %c0_12, %c0_13] : memref<2x32x64xf32, #tpu.memory_space<vmem>>, vector<1x32x64xf32>
    %33 = vector.shape_cast %32 : vector<1x32x64xf32> to vector<32x64xf32>
    %34 = vector.shape_cast %31 : vector<32x64xf32> to vector<1x32x64xf32>
    tpu.vector_store %arg3[%c1, %c0_12, %c0_13], %34 {strides = array<i32>} : memref<2x32x64xf32, #tpu.memory_space<vmem>>, vector<1x32x64xf32>,
    return
  }
  func.func @transform_0(%arg0: i32) -> (i32, i32) {
    %c0_i32 = arith.constant 0 : i32
    %c0_i32_0 = arith.constant 0 : i32
    return %arg0, %c0_i32 : i32, i32
  }
  func.func @transform_1(%arg0: i32) -> (i32, i32) {
    %c0_i32 = arith.constant 0 : i32
    %c0_i32_0 = arith.constant 0 : i32
    return %arg0, %c0_i32 : i32, i32
  }
  func.func @transform_2(%arg0: i32) -> (i32, i32, i32) {
    %c0_i32 = arith.constant 0 : i32
    %c0_i32_0 = arith.constant 0 : i32
    %c0_i32_1 = arith.constant 0 : i32
    return %c0_i32, %arg0, %c0_i32_0 : i32, i32, i32
  }
}

</mosaic_0001>

<llo_original>
// kernel: custom-call.2
$region0: #{custom-call.2}
  %s0 = inlined_call_operand.vmem [shape: f32[2,32,32], index: 0, kind: input, shape index: {}]
  %s1 = inlined_call_operand.vmem [shape: f32[2,32,32], index: 1, kind: input, shape index: {}]
  %s2 = inlined_call_operand.vmem [shape: f32[2,32,32], index: 2, kind: input, shape index: {}]
  %s3 = inlined_call_operand.vmem [shape: f32[2,32,32], index: 3, kind: input, shape index: {}]
  %s4 = inlined_call_operand.vmem [shape: f32[2,32], index: 4, kind: output, shape index: {0}]
  %s5 = inlined_call_operand.vmem [shape: f32[2,32], index: 5, kind: output, shape index: {1}]
  %s6 = inlined_call_operand.vmem [shape: f32[2,32,32], index: 6, kind: output, shape index: {2}]
  %s7 = inlined_call_operand.vmem [shape: f32[2,32,32], index: 7, kind: output, shape index: {3}]
  %s8 = inlined_call_operand.vmem [shape: f32[2,32,32], index: 8, kind: output, shape index: {4}]
  %s9 = inlined_call_operand.vmem [shape: f32[2,32,32], index: 9, kind: output, shape index: {5}]
  %10 = xla_tuple %s4, %s5, %s6, %s7, %s8, %s9
  $region1: #{custom-call.2} parent=0
    #allocation0 [shape = 'u8[32768]{0}', space=vmem, size = 0x8000, scoped, tag = 'operand span for operand 0']
    #allocation1 [shape = 'u8[32768]{0}', space=vmem, size = 0x8000, scoped, tag = 'operand span for operand 1']
    #allocation2 [shape = 'u8[32768]{0}', space=vmem, size = 0x8000, scoped, tag = 'operand span for operand 2']
    #allocation3 [shape = 'u8[32768]{0}', space=vmem, size = 0x8000, scoped, tag = 'operand span for operand 3']
    #allocation4 [shape = 'u8[4096]{0}', space=vmem, size = 0x1000, scoped, tag = 'operand span for operand 4']
    #allocation5 [shape = 'u8[2048]{0}', space=vmem, size = 0x800, scoped, tag = 'packed  for operand 4']
    #allocation6 [shape = 'u8[4096]{0}', space=vmem, size = 0x1000, scoped, tag = 'operand span for operand 5']
    #allocation7 [shape = 'u8[2048]{0}', space=vmem, size = 0x800, scoped, tag = 'packed  for operand 5']
    #allocation8 [shape = 'u8[32768]{0}', space=vmem, size = 0x8000, scoped, tag = 'operand span for operand 6']
    #allocation9 [shape = 'u8[32768]{0}', space=vmem, size = 0x8000, scoped, tag = 'operand span for operand 7']
    #allocation10 [shape = 'u8[32768]{0}', space=vmem, size = 0x8000, scoped, tag = 'operand span for operand 8']
    #allocation11 [shape = 'u8[32768]{0}', space=vmem, size = 0x8000, scoped, tag = 'operand span for operand 9']
    loop: start=0, step=1, limit=4
    $region2: #{custom-call.2} parent=1 // loop_pre_header
      _
    $region3: #{custom-call.2} parent=1 // loop_header
      %s12 = sphi 0, %s16
      %p13 = scmp.ge.s32.totalorder %s12, 4
      %s24 = sphi 0, %s26
      %s27 = sphi 0, %s24
      %s28 = sphi 0, %s27
      %s44 = sphi 0, %s28
      %s52 = sphi 0, %s54
      %s55 = sphi 0, %s52
      %s56 = sphi 0, %s55
      %s72 = sphi 0, %s56
    $region4: #{custom-call.2} parent=1 // loop_header_branch
      %15 = sbr.rel (%p13) target = $region8
    $region5: #{custom-call.2} parent=1 // loop_body
      %s17 = ssub.s32 %s12, 1
      %s18 = ssub.s32 %s12, 2
      %s19 = sadd.s32 %s12, 1
      %s20 = sshrl.u32 %s12, 3
      %s21 = sshrl.u32 %s19, 3
      %s22 = ssub.s32 %s20, %s21
      %p23 = scmp.eq.s32.totalorder %s22, 0
      %s25 = sadd.s32 %s24, 1
      %s26 = scalar_select %p23, %s24, %s25
      %p29 = pneg %p23
      %p30 = scmp.eq.s32.totalorder %s12, 1
      %p31 = por %p29, %p30
      %p32 = scmp.ne.s32.totalorder %s24, %s27
      %p33 = scmp.eq.s32.totalorder %s12, 0
      %p34 = por %p32, %p33
      %p35 = scmp.ne.s32.totalorder %s24, %s27
      %p36 = scmp.eq.s32.totalorder %s17, 1
      %p37 = por %p35, %p36
      %p38 = scmp.ne.s32.totalorder %s27, %s28
      %p39 = scmp.eq.s32.totalorder %s17, 0
      %p40 = por %p38, %p39
      %p41 = scmp.ne.s32.totalorder %s27, %s28
      %p42 = scmp.eq.s32.totalorder %s18, 1
      %p43 = por %p41, %p42
      %p45 = scmp.ne.s32.totalorder %s28, %s44
      %p46 = scmp.eq.s32.totalorder %s18, 0
      %p47 = por %p45, %p46
      %s48 = sshrl.u32 %s12, 3
      %s49 = sshrl.u32 %s19, 3
      %s50 = ssub.s32 %s48, %s49
      %p51 = scmp.eq.s32.totalorder %s50, 0
      %s53 = sadd.s32 %s52, 1
      %s54 = scalar_select %p51, %s52, %s53
      %p57 = pneg %p51
      %p58 = scmp.eq.s32.totalorder %s12, 1
      %p59 = por %p57, %p58
      %p60 = scmp.ne.s32.totalorder %s52, %s55
      %p61 = scmp.eq.s32.totalorder %s12, 0
      %p62 = por %p60, %p61
      %p63 = scmp.ne.s32.totalorder %s52, %s55
      %p64 = scmp.eq.s32.totalorder %s17, 1
      %p65 = por %p63, %p64
      %p66 = scmp.ne.s32.totalorder %s55, %s56
      %p67 = scmp.eq.s32.totalorder %s17, 0
      %p68 = por %p66, %p67
      %p69 = scmp.ne.s32.totalorder %s55, %s56
      %p70 = scmp.eq.s32.totalorder %s18, 1
      %p71 = por %p69, %p70
      %p73 = scmp.ne.s32.totalorder %s56, %s72
      %p74 = scmp.eq.s32.totalorder %s18, 0
      %p75 = por %p73, %p74
      %p76 = scmp.le.s32.totalorder 1, %s12
      %p77 = scmp.lt.s32.totalorder %s12, 3
      %p78 = pnand %p76, %p77
      %p79 = pneg %p78
      // Predicated region
      $region9: #{custom-call.2} parent=5 // pred_check
        _
      $region10: #{custom-call.2} parent=5 // pred_check_branch
        %81 = sbr.rel (%p78) target = $region12
      $region11: #{custom-call.2} parent=5 // pred_region
        %s82 = ssub.s32 %s12, 1
      $region12: #{custom-call.2} parent=5 // pred_fallthru
        _
      %p83 = scmp.lt.s32.totalorder %s12, 2
      // Predicated region
      $region13: #{custom-call.2} parent=5 // pred_check
        %p84 = pneg %p83
      $region14: #{custom-call.2} parent=5 // pred_check_branch
        %86 = sbr.rel (%p84) target = $region16
      $region15: #{custom-call.2} parent=5 // pred_region
        %s87 = sand.u32 %s12, 1
        %s88 = sand.u32 %s12, 1
        %s89 = smul.addr %s88, 32
        %s90 = scalar_lea.vmem [#allocation0], %s89
        %s91 = smul.addr %s12, 32
        %s92 = scalar_lea.vmem %s0, %s91
        // Predicated region
        $region17: #{custom-call.2} parent=15 // pred_check
          _
        $region18: #{custom-call.2} parent=15 // pred_check_branch
          %94 = sbr.rel (0) target = $region20
        $region19: #{custom-call.2} parent=15 // pred_region
          // Predicated region
          $region21: #{custom-call.2} parent=19 // pred_check
            _
          $region22: #{custom-call.2} parent=19 // pred_check_branch
            %96 = sbr.rel (0) target = $region24
          $region23: #{custom-call.2} parent=19 // pred_region
            loop: start=0, step=1, limit=1
            $region25: #{custom-call.2} parent=23 // loop_pre_header
              _
            $region26: #{custom-call.2} parent=23 // loop_header
              %s98 = sphi 0, %s102
              %p99 = scmp.ge.s32.totalorder %s98, 1
              %s103 = sphi %s92, %s92
              %s104 = sphi %s90, %s90
            $region27: #{custom-call.2} parent=23 // loop_header_branch
              %101 = sbr.rel (%p99) target = $region31
            $region28: #{custom-call.2} parent=23 // loop_body
              %v105 = vld [vmem:[%s103] sm:$0xff]
              %106 = vst [vmem:[%s104] sm:$0xff] %v105
              %v107 = vld [vmem:[%s103 + $0x8] sm:$0xff]
              %108 = vst [vmem:[%s104 + $0x8] sm:$0xff] %v107
              %v109 = vld [vmem:[%s103 + $0x10] sm:$0xff]
              %110 = vst [vmem:[%s104 + $0x10] sm:$0xff] %v109
              %v111 = vld [vmem:[%s103 + $0x18] sm:$0xff]
              %112 = vst [vmem:[%s104 + $0x18] sm:$0xff] %v111
            $region29: #{custom-call.2} parent=23 // loop_footer
              %s102 = sadd.s32 1, %s98
            $region30: #{custom-call.2} parent=23 // loop_footer_branch
              %97 = sbr.rel target = $region26
            $region31: #{custom-call.2} parent=23 // loop_exit
              _
          $region24: #{custom-call.2} parent=19 // pred_fallthru
            _
          // Predicated region
          $region32: #{custom-call.2} parent=19 // pred_check
            _
          $region33: #{custom-call.2} parent=19 // pred_check_branch
            %114 = sbr.rel target = $region35
          $region34: #{custom-call.2} parent=19 // pred_region
            _
          $region35: #{custom-call.2} parent=19 // pred_fallthru
            _
        $region20: #{custom-call.2} parent=15 // pred_fallthru
          _
        %115 = vnop
        %s116 = sand.u32 %s12, 1
        %s117 = sand.u32 %s12, 1
        %s118 = smul.addr %s117, 32
        %s119 = scalar_lea.vmem [#allocation1], %s118
        %s120 = smul.addr %s12, 32
        %s121 = scalar_lea.vmem %s1, %s120
        // Predicated region
        $region36: #{custom-call.2} parent=15 // pred_check
          _
        $region37: #{custom-call.2} parent=15 // pred_check_branch
          %123 = sbr.rel (0) target = $region39
        $region38: #{custom-call.2} parent=15 // pred_region
          // Predicated region
          $region40: #{custom-call.2} parent=38 // pred_check
            _
          $region41: #{custom-call.2} parent=38 // pred_check_branch
            %125 = sbr.rel (0) target = $region43
          $region42: #{custom-call.2} parent=38 // pred_region
            loop: start=0, step=1, limit=1
            $region44: #{custom-call.2} parent=42 // loop_pre_header
              _
            $region45: #{custom-call.2} parent=42 // loop_header
              %s127 = sphi 0, %s131
              %p128 = scmp.ge.s32.totalorder %s127, 1
              %s132 = sphi %s121, %s121
              %s133 = sphi %s119, %s119
            $region46: #{custom-call.2} parent=42 // loop_header_branch
              %130 = sbr.rel (%p128) target = $region50
            $region47: #{custom-call.2} parent=42 // loop_body
              %v134 = vld [vmem:[%s132] sm:$0xff]
              %135 = vst [vmem:[%s133] sm:$0xff] %v134
              %v136 = vld [vmem:[%s132 + $0x8] sm:$0xff]
              %137 = vst [vmem:[%s133 + $0x8] sm:$0xff] %v136
              %v138 = vld [vmem:[%s132 + $0x10] sm:$0xff]
              %139 = vst [vmem:[%s133 + $0x10] sm:$0xff] %v138
              %v140 = vld [vmem:[%s132 + $0x18] sm:$0xff]
              %141 = vst [vmem:[%s133 + $0x18] sm:$0xff] %v140
            $region48: #{custom-call.2} parent=42 // loop_footer
              %s131 = sadd.s32 1, %s127
            $region49: #{custom-call.2} parent=42 // loop_footer_branch
              %126 = sbr.rel target = $region45
            $region50: #{custom-call.2} parent=42 // loop_exit
              _
          $region43: #{custom-call.2} parent=38 // pred_fallthru
            _
          // Predicated region
          $region51: #{custom-call.2} parent=38 // pred_check
            _
          $region52: #{custom-call.2} parent=38 // pred_check_branch
            %143 = sbr.rel target = $region54
          $region53: #{custom-call.2} parent=38 // pred_region
            _
          $region54: #{custom-call.2} parent=38 // pred_fallthru
            _
        $region39: #{custom-call.2} parent=15 // pred_fallthru
          _
        %144 = vnop
        %s145 = sand.u32 %s12, 1
        %s146 = sand.u32 %s12, 1
        %s147 = smul.addr %s146, 32
        %s148 = scalar_lea.vmem [#allocation2], %s147
        %s149 = smul.addr %s12, 32
        %s150 = scalar_lea.vmem %s2, %s149
        // Predicated region
        $region55: #{custom-call.2} parent=15 // pred_check
          _
        $region56: #{custom-call.2} parent=15 // pred_check_branch
          %152 = sbr.rel (0) target = $region58
        $region57: #{custom-call.2} parent=15 // pred_region
          // Predicated region
          $region59: #{custom-call.2} parent=57 // pred_check
            _
          $region60: #{custom-call.2} parent=57 // pred_check_branch
            %154 = sbr.rel (0) target = $region62
          $region61: #{custom-call.2} parent=57 // pred_region
            loop: start=0, step=1, limit=1
            $region63: #{custom-call.2} parent=61 // loop_pre_header
              _
            $region64: #{custom-call.2} parent=61 // loop_header
              %s156 = sphi 0, %s160
              %p157 = scmp.ge.s32.totalorder %s156, 1
              %s161 = sphi %s150, %s150
              %s162 = sphi %s148, %s148
            $region65: #{custom-call.2} parent=61 // loop_header_branch
              %159 = sbr.rel (%p157) target = $region69
            $region66: #{custom-call.2} parent=61 // loop_body
              %v163 = vld [vmem:[%s161] sm:$0xff]
              %164 = vst [vmem:[%s162] sm:$0xff] %v163
              %v165 = vld [vmem:[%s161 + $0x8] sm:$0xff]
              %166 = vst [vmem:[%s162 + $0x8] sm:$0xff] %v165
              %v167 = vld [vmem:[%s161 + $0x10] sm:$0xff]
              %168 = vst [vmem:[%s162 + $0x10] sm:$0xff] %v167
              %v169 = vld [vmem:[%s161 + $0x18] sm:$0xff]
              %170 = vst [vmem:[%s162 + $0x18] sm:$0xff] %v169
            $region67: #{custom-call.2} parent=61 // loop_footer
              %s160 = sadd.s32 1, %s156
            $region68: #{custom-call.2} parent=61 // loop_footer_branch
              %155 = sbr.rel target = $region64
            $region69: #{custom-call.2} parent=61 // loop_exit
              _
          $region62: #{custom-call.2} parent=57 // pred_fallthru
            _
          // Predicated region
          $region70: #{custom-call.2} parent=57 // pred_check
            _
          $region71: #{custom-call.2} parent=57 // pred_check_branch
            %172 = sbr.rel target = $region73
          $region72: #{custom-call.2} parent=57 // pred_region
            _
          $region73: #{custom-call.2} parent=57 // pred_fallthru
            _
        $region58: #{custom-call.2} parent=15 // pred_fallthru
          _
        %173 = vnop
        %s174 = sand.u32 %s12, 1
        %s175 = sand.u32 %s12, 1
        %s176 = smul.addr %s175, 32
        %s177 = scalar_lea.vmem [#allocation3], %s176
        %s178 = smul.addr %s12, 32
        %s179 = scalar_lea.vmem %s3, %s178
        // Predicated region
        $region74: #{custom-call.2} parent=15 // pred_check
          _
        $region75: #{custom-call.2} parent=15 // pred_check_branch
          %181 = sbr.rel (0) target = $region77
        $region76: #{custom-call.2} parent=15 // pred_region
          // Predicated region
          $region78: #{custom-call.2} parent=76 // pred_check
            _
          $region79: #{custom-call.2} parent=76 // pred_check_branch
            %183 = sbr.rel (0) target = $region81
          $region80: #{custom-call.2} parent=76 // pred_region
            loop: start=0, step=1, limit=1
            $region82: #{custom-call.2} parent=80 // loop_pre_header
              _
            $region83: #{custom-call.2} parent=80 // loop_header
              %s185 = sphi 0, %s189
              %p186 = scmp.ge.s32.totalorder %s185, 1
              %s190 = sphi %s179, %s179
              %s191 = sphi %s177, %s177
            $region84: #{custom-call.2} parent=80 // loop_header_branch
              %188 = sbr.rel (%p186) target = $region88
            $region85: #{custom-call.2} parent=80 // loop_body
              %v192 = vld [vmem:[%s190] sm:$0xff]
              %193 = vst [vmem:[%s191] sm:$0xff] %v192
              %v194 = vld [vmem:[%s190 + $0x8] sm:$0xff]
              %195 = vst [vmem:[%s191 + $0x8] sm:$0xff] %v194
              %v196 = vld [vmem:[%s190 + $0x10] sm:$0xff]
              %197 = vst [vmem:[%s191 + $0x10] sm:$0xff] %v196
              %v198 = vld [vmem:[%s190 + $0x18] sm:$0xff]
              %199 = vst [vmem:[%s191 + $0x18] sm:$0xff] %v198
            $region86: #{custom-call.2} parent=80 // loop_footer
              %s189 = sadd.s32 1, %s185
            $region87: #{custom-call.2} parent=80 // loop_footer_branch
              %184 = sbr.rel target = $region83
            $region88: #{custom-call.2} parent=80 // loop_exit
              _
          $region81: #{custom-call.2} parent=76 // pred_fallthru
            _
          // Predicated region
          $region89: #{custom-call.2} parent=76 // pred_check
            _
          $region90: #{custom-call.2} parent=76 // pred_check_branch
            %201 = sbr.rel target = $region92
          $region91: #{custom-call.2} parent=76 // pred_region
            _
          $region92: #{custom-call.2} parent=76 // pred_fallthru
            _
        $region77: #{custom-call.2} parent=15 // pred_fallthru
          _
        %202 = vnop
      $region16: #{custom-call.2} parent=5 // pred_fallthru
        _
      %p203 = scmp.le.s32.totalorder 1, %s12
      %p204 = scmp.lt.s32.totalorder %s12, 3
      %p205 = pnand %p203, %p204
      %p206 = pneg %p205
      // Predicated region
      $region93: #{custom-call.2} parent=5 // pred_check
        _
      $region94: #{custom-call.2} parent=5 // pred_check_branch
        %208 = sbr.rel (%p205) target = $region96
      $region95: #{custom-call.2} parent=5 // pred_region
        #allocation12 [shape = 'f32[32,32]{1,0}', space=vmem, size = 0x4000, scoped, tag = 'a top-left matrix']
        #allocation13 [shape = 'f32[32,32]{1,0}', space=vmem, size = 0x4000, scoped, tag = 'a top-right matrix']
        #allocation14 [shape = 'f32[32,32]{1,0}', space=vmem, size = 0x4000, scoped, tag = 'a bottom-left matrix']
        #allocation15 [shape = 'f32[32,32]{1,0}', space=vmem, size = 0x4000, scoped, tag = 'a bottom-right matrix']
        %s209 = ssub.s32 %s12, 1
        %s210 = sand.u32 %s17, 1
        %s211 = sand.u32 %s17, 1
        %s212 = smul.addr %s211, 32
        %s213 = scalar_lea.vmem [#allocation0], %s212
        %s214 = sand.u32 %s17, 1
        %s215 = sand.u32 %s17, 1
        %s216 = smul.addr %s215, 32
        %s217 = scalar_lea.vmem [#allocation1], %s216
        %s218 = sand.u32 %s17, 1
        %s219 = sand.u32 %s17, 1
        %s220 = smul.addr %s219, 32
        %s221 = scalar_lea.vmem [#allocation2], %s220
        %s222 = sand.u32 %s17, 1
        %s223 = sand.u32 %s17, 1
        %s224 = smul.addr %s223, 32
        %s225 = scalar_lea.vmem [#allocation3], %s224
        %s226 = sand.u32 %s17, 1
        %s227 = sand.u32 %s17, 1
        %s228 = smul.addr %s227, 32
        %s229 = scalar_lea.vmem [#allocation0], %s228
        %s230 = sand.u32 %s17, 1
        %s231 = sand.u32 %s17, 1
        %s232 = smul.addr %s231, 32
        %s233 = scalar_lea.vmem [#allocation1], %s232
        %s234 = sand.u32 %s17, 1
        %s235 = sand.u32 %s17, 1
        %s236 = smul.addr %s235, 32
        %s237 = scalar_lea.vmem [#allocation2], %s236
        %s238 = sand.u32 %s17, 1
        %s239 = sand.u32 %s17, 1
        %s240 = smul.addr %s239, 32
        %s241 = scalar_lea.vmem [#allocation3], %s240
        %p242 = pneg %p40
        %p243 = pneg %p37
        %s244 = sand.u32 %s27, 1
        %s245 = sand.u32 %s27, 1
        %s246 = smul.addr %s245, 2
        %s247 = scalar_lea.vmem [#allocation5], %s246
        %p248 = pneg %p68
        %p249 = pneg %p65
        %s250 = sand.u32 %s55, 1
        %s251 = sand.u32 %s55, 1
        %s252 = smul.addr %s251, 2
        %s253 = scalar_lea.vmem [#allocation7], %s252
        %s254 = sand.u32 %s17, 1
        %s255 = sand.u32 %s17, 1
        %s256 = smul.addr %s255, 32
        %s257 = scalar_lea.vmem [#allocation8], %s256
        %s258 = sand.u32 %s17, 1
        %s259 = sand.u32 %s17, 1
        %s260 = smul.addr %s259, 32
        %s261 = scalar_lea.vmem [#allocation9], %s260
        %s262 = sand.u32 %s17, 1
        %s263 = sand.u32 %s17, 1
        %s264 = smul.addr %s263, 32
        %s265 = scalar_lea.vmem [#allocation10], %s264
        %s266 = sand.u32 %s17, 1
        %s267 = sand.u32 %s17, 1
        %s268 = smul.addr %s267, 32
        %s269 = scalar_lea.vmem [#allocation11], %s268
        %s270 = sshrl.u32 %s17, 3
        %s271 = sshrl.u32 %s17, 3
        %s272 = smov [#allocation12]
        %v273 = vld [vmem:[%s213] sm:$0xff]
        %274 = vst [vmem:[%s272] sm:$0xff] %v273
        %s275 = scalar_lea.vmem %s272, 8
        %s276 = scalar_lea.vmem %s213, 8 [#allocation0]
        %v277 = vld [vmem:[%s276] sm:$0xff]
        %278 = vst [vmem:[%s275] sm:$0xff] %v277
        %s279 = scalar_lea.vmem %s272, 16
        %s280 = scalar_lea.vmem %s213, 16 [#allocation0]
        %v281 = vld [vmem:[%s280] sm:$0xff]
        %282 = vst [vmem:[%s279] sm:$0xff] %v281
        %s283 = scalar_lea.vmem %s272, 24
        %s284 = scalar_lea.vmem %s213, 24 [#allocation0]
        %v285 = vld [vmem:[%s284] sm:$0xff]
        %286 = vst [vmem:[%s283] sm:$0xff] %v285
        %s287 = smov [#allocation13]
        %v288 = vld [vmem:[%s217] sm:$0xff]
        %289 = vst [vmem:[%s287] sm:$0xff] %v288
        %s290 = scalar_lea.vmem %s287, 8
        %s291 = scalar_lea.vmem %s217, 8 [#allocation1]
        %v292 = vld [vmem:[%s291] sm:$0xff]
        %293 = vst [vmem:[%s290] sm:$0xff] %v292
        %s294 = scalar_lea.vmem %s287, 16
        %s295 = scalar_lea.vmem %s217, 16 [#allocation1]
        %v296 = vld [vmem:[%s295] sm:$0xff]
        %297 = vst [vmem:[%s294] sm:$0xff] %v296
        %s298 = scalar_lea.vmem %s287, 24
        %s299 = scalar_lea.vmem %s217, 24 [#allocation1]
        %v300 = vld [vmem:[%s299] sm:$0xff]
        %301 = vst [vmem:[%s298] sm:$0xff] %v300
        %s302 = smov [#allocation14]
        %v303 = vld [vmem:[%s221] sm:$0xff]
        %304 = vst [vmem:[%s302] sm:$0xff] %v303
        %s305 = scalar_lea.vmem %s302, 8
        %s306 = scalar_lea.vmem %s221, 8 [#allocation2]
        %v307 = vld [vmem:[%s306] sm:$0xff]
        %308 = vst [vmem:[%s305] sm:$0xff] %v307
        %s309 = scalar_lea.vmem %s302, 16
        %s310 = scalar_lea.vmem %s221, 16 [#allocation2]
        %v311 = vld [vmem:[%s310] sm:$0xff]
        %312 = vst [vmem:[%s309] sm:$0xff] %v311
        %s313 = scalar_lea.vmem %s302, 24
        %s314 = scalar_lea.vmem %s221, 24 [#allocation2]
        %v315 = vld [vmem:[%s314] sm:$0xff]
        %316 = vst [vmem:[%s313] sm:$0xff] %v315
        %s317 = smov [#allocation15]
        %v318 = vld [vmem:[%s225] sm:$0xff]
        %319 = vst [vmem:[%s317] sm:$0xff] %v318
        %s320 = scalar_lea.vmem %s317, 8
        %s321 = scalar_lea.vmem %s225, 8 [#allocation3]
        %v322 = vld [vmem:[%s321] sm:$0xff]
        %323 = vst [vmem:[%s320] sm:$0xff] %v322
        %s324 = scalar_lea.vmem %s317, 16
        %s325 = scalar_lea.vmem %s225, 16 [#allocation3]
        %v326 = vld [vmem:[%s325] sm:$0xff]
        %327 = vst [vmem:[%s324] sm:$0xff] %v326
        %s328 = scalar_lea.vmem %s317, 24
        %s329 = scalar_lea.vmem %s225, 24 [#allocation3]
        %v330 = vld [vmem:[%s329] sm:$0xff]
        %331 = vst [vmem:[%s328] sm:$0xff] %v330
        %332 = vst [vmem:[%s257] sm:$0xff] 0.0
        %s333 = scalar_lea.vmem %s257, 8 [#allocation8]
        %334 = vst [vmem:[%s333] sm:$0xff] 0.0
        %s335 = scalar_lea.vmem %s257, 16 [#allocation8]
        %336 = vst [vmem:[%s335] sm:$0xff] 0.0
        %s337 = scalar_lea.vmem %s257, 24 [#allocation8]
        %338 = vst [vmem:[%s337] sm:$0xff] 0.0
        %339 = vst [vmem:[%s261] sm:$0xff] 0.0
        %s340 = scalar_lea.vmem %s261, 8 [#allocation9]
        %341 = vst [vmem:[%s340] sm:$0xff] 0.0
        %s342 = scalar_lea.vmem %s261, 16 [#allocation9]
        %343 = vst [vmem:[%s342] sm:$0xff] 0.0
        %s344 = scalar_lea.vmem %s261, 24 [#allocation9]
        %345 = vst [vmem:[%s344] sm:$0xff] 0.0
        %346 = vst [vmem:[%s265] sm:$0xff] 0.0
        %s347 = scalar_lea.vmem %s265, 8 [#allocation10]
        %348 = vst [vmem:[%s347] sm:$0xff] 0.0
        %s349 = scalar_lea.vmem %s265, 16 [#allocation10]
        %350 = vst [vmem:[%s349] sm:$0xff] 0.0
        %s351 = scalar_lea.vmem %s265, 24 [#allocation10]
        %352 = vst [vmem:[%s351] sm:$0xff] 0.0
        %353 = vst [vmem:[%s269] sm:$0xff] 0.0
        %s354 = scalar_lea.vmem %s269, 8 [#allocation11]
        %355 = vst [vmem:[%s354] sm:$0xff] 0.0
        %s356 = scalar_lea.vmem %s269, 16 [#allocation11]
        %357 = vst [vmem:[%s356] sm:$0xff] 0.0
        %s358 = scalar_lea.vmem %s269, 24 [#allocation11]
        %359 = vst [vmem:[%s358] sm:$0xff] 0.0
        %s360 = smov %s257
        %v361 = vlaneseq
        %v362 = vand.u32 %v361, 127
        %v363 = vmov %v362
        %v364 = vlaneseq
        %v365 = vshrl.u32 %v364, 7
        %v366 = vmov %v365
        %v367 = vld [vmem:[%s360] sm:$0xff]
        %vm370 = vcmp.eq.s32.totalorder %v366, %v363
        %v371 = vsel %vm370, 1.0, %v367
        %372 = vst [vmem:[%s360] sm:$0xff] %v371
        %s373 = scalar_lea.vmem %s360, 8
        %v374 = vld [vmem:[%s373] sm:$0xff]
        %v376 = vadd.s32 %v366, 8
        %vm377 = vcmp.eq.s32.totalorder %v376, %v363
        %v378 = vsel %vm377, 1.0, %v374
        %379 = vst [vmem:[%s373] sm:$0xff] %v378
        %s380 = scalar_lea.vmem %s360, 16
        %v381 = vld [vmem:[%s380] sm:$0xff]
        %v383 = vadd.s32 %v366, 16
        %vm384 = vcmp.eq.s32.totalorder %v383, %v363
        %v385 = vsel %vm384, 1.0, %v381
        %386 = vst [vmem:[%s380] sm:$0xff] %v385
        %s387 = scalar_lea.vmem %s360, 24
        %v388 = vld [vmem:[%s387] sm:$0xff]
        %v390 = vadd.s32 %v366, 24
        %vm391 = vcmp.eq.s32.totalorder %v390, %v363
        %v392 = vsel %vm391, 1.0, %v388
        %393 = vst [vmem:[%s387] sm:$0xff] %v392
        %s394 = smov %s269
        %v395 = vlaneseq
        %v396 = vand.u32 %v395, 127
        %v397 = vmov %v396
        %v398 = vlaneseq
        %v399 = vshrl.u32 %v398, 7
        %v400 = vmov %v399
        %v401 = vld [vmem:[%s394] sm:$0xff]
        %vm404 = vcmp.eq.s32.totalorder %v400, %v397
        %v405 = vsel %vm404, 1.0, %v401
        %406 = vst [vmem:[%s394] sm:$0xff] %v405
        %s407 = scalar_lea.vmem %s394, 8
        %v408 = vld [vmem:[%s407] sm:$0xff]
        %v410 = vadd.s32 %v400, 8
        %vm411 = vcmp.eq.s32.totalorder %v410, %v397
        %v412 = vsel %vm411, 1.0, %v408
        %413 = vst [vmem:[%s407] sm:$0xff] %v412
        %s414 = scalar_lea.vmem %s394, 16
        %v415 = vld [vmem:[%s414] sm:$0xff]
        %v417 = vadd.s32 %v400, 16
        %vm418 = vcmp.eq.s32.totalorder %v417, %v397
        %v419 = vsel %vm418, 1.0, %v415
        %420 = vst [vmem:[%s414] sm:$0xff] %v419
        %s421 = scalar_lea.vmem %s394, 24
        %v422 = vld [vmem:[%s421] sm:$0xff]
        %v424 = vadd.s32 %v400, 24
        %vm425 = vcmp.eq.s32.totalorder %v424, %v397
        %v426 = vsel %vm425, 1.0, %v422
        %427 = vst [vmem:[%s421] sm:$0xff] %v426
        // While loop
        $region97: #{custom-call.2} parent=95 // loop_pre_header
          _
        $region98: #{custom-call.2} parent=95 // loop_header
          %s429 = sphi 0, %s2079
          %v430 = vlaneseq
          %v431 = vand.u32 %v430, 127
          %v432 = vmov %v431
          %v433 = vlaneseq
          %v434 = vshrl.u32 %v433, 7
          %v435 = vmov %v434
          %s436 = smov [#allocation12]
          %v437 = vlaneseq
          %v438 = vand.u32 %v437, 127
          %vm439 = vcmp.ge.s32.totalorder %v438, 0
          %vm440 = vcmp.lt.s32.totalorder %v438, 32
          %vm441 = vmand %vm439, %vm440
          %v442 = vld [vmem:[%s436] sm:$0xff]
          %v443 = vsel %vm441, %v442, 0.0
          %v444 = vmul.f32 %v443, %v443
          %vm447 = vcmp.eq.s32.totalorder %v435, %v432
          %v448 = vsel %vm447, 0.0, %v444
          %s449 = scalar_lea.vmem %s436, 8
          %v450 = vld [vmem:[%s449] sm:$0xff]
          %v451 = vsel %vm441, %v450, 0.0
          %v452 = vmul.f32 %v451, %v451
          %v454 = vadd.s32 %v435, 8
          %vm455 = vcmp.eq.s32.totalorder %v454, %v432
          %v456 = vsel %vm455, 0.0, %v452
          %v457 = vadd.f32 %v448, %v456
          %v458 = vadd.f32 %v444, %v452
          %s459 = scalar_lea.vmem %s436, 16
          %v460 = vld [vmem:[%s459] sm:$0xff]
          %v461 = vsel %vm441, %v460, 0.0
          %v462 = vmul.f32 %v461, %v461
          %v464 = vadd.s32 %v435, 16
          %vm465 = vcmp.eq.s32.totalorder %v464, %v432
          %v466 = vsel %vm465, 0.0, %v462
          %v467 = vadd.f32 %v457, %v466
          %v468 = vadd.f32 %v458, %v462
          %s469 = scalar_lea.vmem %s436, 24
          %v470 = vld [vmem:[%s469] sm:$0xff]
          %v471 = vsel %vm441, %v470, 0.0
          %v472 = vmul.f32 %v471, %v471
          %v474 = vadd.s32 %v435, 24
          %vm475 = vcmp.eq.s32.totalorder %v474, %v432
          %v476 = vsel %vm475, 0.0, %v472
          %v477 = vadd.f32 %v467, %v476
          %v478 = vadd.f32 %v468, %v472
          %v479 = vlaneseq
          %v480 = vand.u32 %v479, 127
          %v481 = vmov %v480
          %v482 = vlaneseq
          %v483 = vshrl.u32 %v482, 7
          %v484 = vmov %v483
          %s485 = smov [#allocation13]
          %v486 = vlaneseq
          %v487 = vand.u32 %v486, 127
          %vm488 = vcmp.ge.s32.totalorder %v487, 0
          %vm489 = vcmp.lt.s32.totalorder %v487, 32
          %vm490 = vmand %vm488, %vm489
          %v491 = vld [vmem:[%s485] sm:$0xff]
          %v492 = vsel %vm490, %v491, 0.0
          %v493 = vmul.f32 %v492, %v492
          %v494 = vadd.f32 %v477, %v493
          %v495 = vadd.f32 %v478, %v493
          %s496 = scalar_lea.vmem %s485, 8
          %v497 = vld [vmem:[%s496] sm:$0xff]
          %v498 = vsel %vm490, %v497, 0.0
          %v499 = vmul.f32 %v498, %v498
          %v500 = vadd.f32 %v494, %v499
          %v501 = vadd.f32 %v495, %v499
          %s502 = scalar_lea.vmem %s485, 16
          %v503 = vld [vmem:[%s502] sm:$0xff]
          %v504 = vsel %vm490, %v503, 0.0
          %v505 = vmul.f32 %v504, %v504
          %v506 = vadd.f32 %v500, %v505
          %v507 = vadd.f32 %v501, %v505
          %s508 = scalar_lea.vmem %s485, 24
          %v509 = vld [vmem:[%s508] sm:$0xff]
          %v510 = vsel %vm490, %v509, 0.0
          %v511 = vmul.f32 %v510, %v510
          %v512 = vadd.f32 %v506, %v511
          %v513 = vadd.f32 %v507, %v511
          %v514 = vlaneseq
          %v515 = vand.u32 %v514, 127
          %v516 = vmov %v515
          %v517 = vlaneseq
          %v518 = vshrl.u32 %v517, 7
          %v519 = vmov %v518
          %s520 = smov [#allocation14]
          %v521 = vlaneseq
          %v522 = vand.u32 %v521, 127
          %vm523 = vcmp.ge.s32.totalorder %v522, 0
          %vm524 = vcmp.lt.s32.totalorder %v522, 32
          %vm525 = vmand %vm523, %vm524
          %v526 = vld [vmem:[%s520] sm:$0xff]
          %v527 = vsel %vm525, %v526, 0.0
          %v528 = vmul.f32 %v527, %v527
          %v529 = vadd.f32 %v512, %v528
          %v530 = vadd.f32 %v513, %v528
          %s531 = scalar_lea.vmem %s520, 8
          %v532 = vld [vmem:[%s531] sm:$0xff]
          %v533 = vsel %vm525, %v532, 0.0
          %v534 = vmul.f32 %v533, %v533
          %v535 = vadd.f32 %v529, %v534
          %v536 = vadd.f32 %v530, %v534
          %s537 = scalar_lea.vmem %s520, 16
          %v538 = vld [vmem:[%s537] sm:$0xff]
          %v539 = vsel %vm525, %v538, 0.0
          %v540 = vmul.f32 %v539, %v539
          %v541 = vadd.f32 %v535, %v540
          %v542 = vadd.f32 %v536, %v540
          %s543 = scalar_lea.vmem %s520, 24
          %v544 = vld [vmem:[%s543] sm:$0xff]
          %v545 = vsel %vm525, %v544, 0.0
          %v546 = vmul.f32 %v545, %v545
          %v547 = vadd.f32 %v541, %v546
          %v548 = vadd.f32 %v542, %v546
          %v549 = vlaneseq
          %v550 = vand.u32 %v549, 127
          %v551 = vmov %v550
          %v552 = vlaneseq
          %v553 = vshrl.u32 %v552, 7
          %v554 = vmov %v553
          %s555 = smov [#allocation15]
          %v556 = vlaneseq
          %v557 = vand.u32 %v556, 127
          %vm558 = vcmp.ge.s32.totalorder %v557, 0
          %vm559 = vcmp.lt.s32.totalorder %v557, 32
          %vm560 = vmand %vm558, %vm559
          %v561 = vld [vmem:[%s555] sm:$0xff]
          %v562 = vsel %vm560, %v561, 0.0
          %v563 = vmul.f32 %v562, %v562
          %vm566 = vcmp.eq.s32.totalorder %v554, %v551
          %v567 = vsel %vm566, 0.0, %v563
          %v568 = vadd.f32 %v547, %v567
          %v569 = vadd.f32 %v548, %v563
          %s570 = scalar_lea.vmem %s555, 8
          %v571 = vld [vmem:[%s570] sm:$0xff]
          %v572 = vsel %vm560, %v571, 0.0
          %v573 = vmul.f32 %v572, %v572
          %v575 = vadd.s32 %v554, 8
          %vm576 = vcmp.eq.s32.totalorder %v575, %v551
          %v577 = vsel %vm576, 0.0, %v573
          %v578 = vadd.f32 %v568, %v577
          %v579 = vadd.f32 %v569, %v573
          %s580 = scalar_lea.vmem %s555, 16
          %v581 = vld [vmem:[%s580] sm:$0xff]
          %v582 = vsel %vm560, %v581, 0.0
          %v583 = vmul.f32 %v582, %v582
          %v585 = vadd.s32 %v554, 16
          %vm586 = vcmp.eq.s32.totalorder %v585, %v551
          %v587 = vsel %vm586, 0.0, %v583
          %v588 = vadd.f32 %v578, %v587
          %v589 = vadd.f32 %v579, %v583
          %s590 = scalar_lea.vmem %s555, 24
          %v591 = vld [vmem:[%s590] sm:$0xff]
          %v592 = vsel %vm560, %v591, 0.0
          %v593 = vmul.f32 %v592, %v592
          %v595 = vadd.s32 %v554, 24
          %vm596 = vcmp.eq.s32.totalorder %v595, %v551
          %v597 = vsel %vm596, 0.0, %v593
          %v598 = vadd.f32 %v588, %v597
          %v599 = vadd.f32 %v589, %v593
          %600 = vadd.xlane.f32.xlu0 %v599
          %v601 = vpop.xlane.xlu0 %600
          %v602 = vrot.slane %v601, 4
          %v603 = vadd.f32 %v601, %v602
          %v604 = vrot.slane %v603, 2
          %v605 = vadd.f32 %v603, %v604
          %v606 = vrot.slane %v605, 1
          %v607 = vadd.f32 %v605, %v606
          %608 = vadd.xlane.f32.xlu0 %v598
          %v609 = vpop.xlane.xlu0 %608
          %v610 = vrot.slane %v609, 4
          %v611 = vadd.f32 %v609, %v610
          %v612 = vrot.slane %v611, 2
          %v613 = vadd.f32 %v611, %v612
          %v614 = vrot.slane %v613, 1
          %v615 = vadd.f32 %v613, %v614
          %s616 = vtos %v615
          %s617 = vtos %v607
          %s618 = smul.f32 1e-10, %s617
          %p619 = scmp.le.f32.partialorder %s616, %s618
          %p620 = scmp.ge.s32.totalorder %s429, 15
          %p621 = por %p619, %p620
        $region99: #{custom-call.2} parent=95 // loop_header_branch
          %2081 = sbr.rel (%p621) target = $region103
        $region100: #{custom-call.2} parent=95 // loop_body
          loop: start=0, step=1, limit=63
          $region104: #{custom-call.2} parent=100 // loop_pre_header
            _
          $region105: #{custom-call.2} parent=100 // loop_header
            %s623 = sphi 0, %s627
            %p624 = scmp.ge.s32.totalorder %s623, 63
          $region106: #{custom-call.2} parent=100 // loop_header_branch
            %626 = sbr.rel (%p624) target = $region110
          $region107: #{custom-call.2} parent=100 // loop_body
            #allocation16 [shape = 'f32[1024]{0}', space=vmem, size = 0x1000, scoped, tag = 'a_tl_diag vmem']
            #allocation17 [shape = 'f32[1024]{0}', space=vmem, size = 0x1000, scoped, tag = 'a_tr_diag vmem']
            #allocation18 [shape = 'f32[1024]{0}', space=vmem, size = 0x1000, scoped, tag = 'a_br_diag vmem']
            #allocation19 [shape = 'f32[1024]{0}', space=vmem, size = 0x1000, scoped, tag = 'rt1 vmem']
            #allocation20 [shape = 'f32[1024]{0}', space=vmem, size = 0x1000, scoped, tag = 'rt2 vmem']
            #allocation21 [shape = 'f32[1024]{0}', space=vmem, size = 0x1000, scoped, tag = 'c vmem']
            #allocation22 [shape = 'f32[1024]{0}', space=vmem, size = 0x1000, scoped, tag = 's vmem']
            #allocation23 [shape = 'f32[16384]{0}', space=vmem, size = 0x10000, scoped, tag = 'c broadcast']
            #allocation24 [shape = 'f32[16384]{0}', space=vmem, size = 0x10000, scoped, tag = 's broadcast']
            %s628 = smov [#allocation12]
            %s629 = smov [#allocation16]
            %v630 = vlaneseq
            %v631 = vand.u32 %v630, 127
            %v632 = vmov %v631
            %v633 = vlaneseq
            %v634 = vshrl.u32 %v633, 7
            %v635 = vmov %v634
            %v636 = vld [vmem:[%s628] sm:$0xff]
            %vm639 = vcmp.eq.s32.totalorder %v635, %v632
            %v640 = vsel %vm639, %v636, 0.0
            %s641 = scalar_lea.vmem %s628, 8
            %v642 = vld [vmem:[%s641] sm:$0xff]
            %v644 = vadd.s32 %v635, 8
            %vm645 = vcmp.eq.s32.totalorder %v644, %v632
            %v646 = vsel %vm645, %v642, %v640
            %s647 = scalar_lea.vmem %s628, 16
            %v648 = vld [vmem:[%s647] sm:$0xff]
            %v650 = vadd.s32 %v635, 16
            %vm651 = vcmp.eq.s32.totalorder %v650, %v632
            %v652 = vsel %vm651, %v648, %v646
            %s653 = scalar_lea.vmem %s628, 24
            %v654 = vld [vmem:[%s653] sm:$0xff]
            %v656 = vadd.s32 %v635, 24
            %vm657 = vcmp.eq.s32.totalorder %v656, %v632
            %v658 = vsel %vm657, %v654, %v652
            %v659 = vrot.slane %v658, 4
            %v660 = vadd.f32 %v658, %v659
            %v661 = vrot.slane %v660, 2
            %v662 = vadd.f32 %v660, %v661
            %v663 = vrot.slane %v662, 1
            %v664 = vadd.f32 %v662, %v663
            %665 = vst [vmem:[%s629] sm:$0x1] %v664
            %s666 = smov [#allocation13]
            %s667 = smov [#allocation17]
            %v668 = vlaneseq
            %v669 = vand.u32 %v668, 127
            %v670 = vmov %v669
            %v671 = vlaneseq
            %v672 = vshrl.u32 %v671, 7
            %v673 = vmov %v672
            %v674 = vld [vmem:[%s666] sm:$0xff]
            %vm677 = vcmp.eq.s32.totalorder %v673, %v670
            %v678 = vsel %vm677, %v674, 0.0
            %s679 = scalar_lea.vmem %s666, 8
            %v680 = vld [vmem:[%s679] sm:$0xff]
            %v682 = vadd.s32 %v673, 8
            %vm683 = vcmp.eq.s32.totalorder %v682, %v670
            %v684 = vsel %vm683, %v680, %v678
            %s685 = scalar_lea.vmem %s666, 16
            %v686 = vld [vmem:[%s685] sm:$0xff]
            %v688 = vadd.s32 %v673, 16
            %vm689 = vcmp.eq.s32.totalorder %v688, %v670
            %v690 = vsel %vm689, %v686, %v684
            %s691 = scalar_lea.vmem %s666, 24
            %v692 = vld [vmem:[%s691] sm:$0xff]
            %v694 = vadd.s32 %v673, 24
            %vm695 = vcmp.eq.s32.totalorder %v694, %v670
            %v696 = vsel %vm695, %v692, %v690
            %v697 = vrot.slane %v696, 4
            %v698 = vadd.f32 %v696, %v697
            %v699 = vrot.slane %v698, 2
            %v700 = vadd.f32 %v698, %v699
            %v701 = vrot.slane %v700, 1
            %v702 = vadd.f32 %v700, %v701
            %703 = vst [vmem:[%s667] sm:$0x1] %v702
            %s704 = smov [#allocation15]
            %s705 = smov [#allocation18]
            %v706 = vlaneseq
            %v707 = vand.u32 %v706, 127
            %v708 = vmov %v707
            %v709 = vlaneseq
            %v710 = vshrl.u32 %v709, 7
            %v711 = vmov %v710
            %v712 = vld [vmem:[%s704] sm:$0xff]
            %vm715 = vcmp.eq.s32.totalorder %v711, %v708
            %v716 = vsel %vm715, %v712, 0.0
            %s717 = scalar_lea.vmem %s704, 8
            %v718 = vld [vmem:[%s717] sm:$0xff]
            %v720 = vadd.s32 %v711, 8
            %vm721 = vcmp.eq.s32.totalorder %v720, %v708
            %v722 = vsel %vm721, %v718, %v716
            %s723 = scalar_lea.vmem %s704, 16
            %v724 = vld [vmem:[%s723] sm:$0xff]
            %v726 = vadd.s32 %v711, 16
            %vm727 = vcmp.eq.s32.totalorder %v726, %v708
            %v728 = vsel %vm727, %v724, %v722
            %s729 = scalar_lea.vmem %s704, 24
            %v730 = vld [vmem:[%s729] sm:$0xff]
            %v732 = vadd.s32 %v711, 24
            %vm733 = vcmp.eq.s32.totalorder %v732, %v708
            %v734 = vsel %vm733, %v730, %v728
            %v735 = vrot.slane %v734, 4
            %v736 = vadd.f32 %v734, %v735
            %v737 = vrot.slane %v736, 2
            %v738 = vadd.f32 %v736, %v737
            %v739 = vrot.slane %v738, 1
            %v740 = vadd.f32 %v738, %v739
            %741 = vst [vmem:[%s705] sm:$0x1] %v740
            %s742 = smov [#allocation21]
            %s743 = smov [#allocation22]
            %s744 = smov [#allocation16]
            %v745 = vld [vmem:[%s744] sm:$0xff]
            %s746 = smov [#allocation17]
            %v747 = vld [vmem:[%s746] sm:$0xff]
            %s748 = smov [#allocation18]
            %v749 = vld [vmem:[%s748] sm:$0xff]
            %v750 = vsub.f32 %v749, %v745
            %v751 = vmul.f32 2.0, %v747
            %v752 = vrcp.pop %v751
            %v753 = vmul.f32 %v751, %v752
            %v754 = vsub.f32 1.0, %v753
            %v755 = vmul.f32 %v752, %v754
            %v756 = vadd.f32 %v752, %v755
            %vm757 = vweird.f32 %v751
            %vm758 = vweird.f32 %v752
            %vm759 = vmor %vm757, %vm758
            %v760 = vsel %vm759, %v752, %v756
            %v761 = vand.u32 2147483647, %v751
            %vm762 = vcmp.eq.f32.partialorder %v761, 8.507059e+37
            %v763 = vand.u32 %v751, 2147483648
            %v764 = vor.u32 1.1754944e-38, %v763
            %v765 = vsel %vm762, %v764, %v760
            %v766 = vmul.f32 %v750, %v765
            %vm767 = vcmp.ge.f32.partialorder %v766, 0.0
            %v768 = vmul.f32 %v766, %v766
            %v769 = vadd.f32 1.0, %v768
            %v770 = vrsqrt.pop %v769
            %v771 = vmul.f32 %v770, %v769
            %v772 = vmul.f32 %v771, %v770
            %v773 = vmul.f32 0.5, %v772
            %v774 = vsub.f32 1.5, %v773
            %v775 = vmul.f32 %v770, %v774
            %v776 = vmul.f32 %v769, %v775
            %vm777 = vcmp.eq.f32.partialorder %v769, inf
            %v778 = vsel %vm777, %v769, %v776
            %vm779 = vcmp.eq.f32.partialorder %v769, 0.0
            %v780 = vand.u32 %v769, 2147483648
            %v781 = vsel %vm779, %v780, %v778
            %v782 = vxor.u32 %v781, 2147483648
            %v783 = vsel %vm767, %v781, %v782
            %v784 = vadd.f32 %v766, %v783
            %v785 = vrcp.pop %v784
            %v786 = vmul.f32 %v784, %v785
            %v787 = vsub.f32 1.0, %v786
            %v788 = vmul.f32 %v785, %v787
            %v789 = vadd.f32 %v785, %v788
            %vm790 = vweird.f32 %v784
            %vm791 = vweird.f32 %v785
            %vm792 = vmor %vm790, %vm791
            %v793 = vsel %vm792, %v785, %v789
            %v794 = vand.u32 2147483647, %v784
            %vm795 = vcmp.eq.f32.partialorder %v794, 8.507059e+37
            %v796 = vand.u32 %v784, 2147483648
            %v797 = vor.u32 1.1754944e-38, %v796
            %v798 = vsel %vm795, %v797, %v793
            %v799 = vand.u32 2147483647, %v745
            %v800 = vand.u32 2147483647, %v747
            %v801 = vand.u32 2147483647, %v749
            %v802 = vmin.f32 %v799, %v801
            %v803 = vmul.f32 1.1920929e-08, %v802
            %vm804 = vcmp.le.f32.partialorder %v800, %v803
            %v805 = vsel %vm804, 0.0, %v798
            %v806 = vmul.f32 %v805, %v805
            %v807 = vadd.f32 1.0, %v806
            %v808 = vrsqrt.pop %v807
            %v809 = vmul.f32 %v808, %v807
            %v810 = vmul.f32 %v809, %v808
            %v811 = vmul.f32 0.5, %v810
            %v812 = vsub.f32 1.5, %v811
            %v813 = vmul.f32 %v808, %v812
            %vm814 = vweird.f32 %v807
            %vm815 = vweird.f32 %v808
            %vm816 = vmor %vm814, %vm815
            %v817 = vsel %vm816, %v808, %v813
            %v818 = vmul.f32 %v805, %v817
            %v819 = vmul.f32 %v805, %v747
            %v820 = vsub.f32 %v745, %v819
            %v821 = vmul.f32 %v805, %v747
            %v822 = vadd.f32 %v749, %v821
            %s823 = smov [#allocation19]
            %824 = vst [vmem:[%s823] sm:$0xff] %v820
            %s825 = smov [#allocation20]
            %826 = vst [vmem:[%s825] sm:$0xff] %v822
            %s827 = smov %s742
            %828 = vst [vmem:[%s827] sm:$0xff] %v817
            %s829 = smov %s743
            %830 = vst [vmem:[%s829] sm:$0xff] %v818
            %s831 = smov [#allocation21]
            %v832 = vld [vmem:[%s831] ss:$0 sm:$0xff]
            %v833 = vlaneseq
            %v834 = vand.u32 %v833, 127
            %v835 = vmov %v834
            %v836 = vlaneseq
            %v837 = vshrl.u32 %v836, 7
            %v838 = vmov %v837
            %vm840 = vcmp.eq.s32.totalorder %v838, %v835
            %v841 = vsel %vm840, %v832, 0.0
            %842 = vadd.xlane.f32.xlu0 %v841
            %v843 = vpop.xlane.xlu0 %842
            %s844 = smov [#allocation23]
            %845 = vst [vmem:[%s844] sm:$0xff] %v843
            %s846 = smov [#allocation21]
            %v847 = vld [vmem:[%s846] ss:$0 sm:$0xff]
            %v848 = vlaneseq
            %v849 = vand.u32 %v848, 127
            %v850 = vmov %v849
            %v851 = vlaneseq
            %v852 = vshrl.u32 %v851, 7
            %v853 = vmov %v852
            %v854 = vadd.s32 %v853, 8
            %vm855 = vcmp.eq.s32.totalorder %v854, %v850
            %v856 = vsel %vm855, %v847, 0.0
            %857 = vadd.xlane.f32.xlu0 %v856
            %v858 = vpop.xlane.xlu0 %857
            %s859 = smov [#allocation23]
            %s860 = scalar_lea.vmem %s859, 8
            %861 = vst [vmem:[%s860] sm:$0xff] %v858
            %s862 = smov [#allocation21]
            %v863 = vld [vmem:[%s862] ss:$0 sm:$0xff]
            %v864 = vlaneseq
            %v865 = vand.u32 %v864, 127
            %v866 = vmov %v865
            %v867 = vlaneseq
            %v868 = vshrl.u32 %v867, 7
            %v869 = vmov %v868
            %v870 = vadd.s32 %v869, 16
            %vm871 = vcmp.eq.s32.totalorder %v870, %v866
            %v872 = vsel %vm871, %v863, 0.0
            %873 = vadd.xlane.f32.xlu0 %v872
            %v874 = vpop.xlane.xlu0 %873
            %s875 = smov [#allocation23]
            %s876 = scalar_lea.vmem %s875, 16
            %877 = vst [vmem:[%s876] sm:$0xff] %v874
            %s878 = smov [#allocation21]
            %v879 = vld [vmem:[%s878] ss:$0 sm:$0xff]
            %v880 = vlaneseq
            %v881 = vand.u32 %v880, 127
            %v882 = vmov %v881
            %v883 = vlaneseq
            %v884 = vshrl.u32 %v883, 7
            %v885 = vmov %v884
            %v886 = vadd.s32 %v885, 24
            %vm887 = vcmp.eq.s32.totalorder %v886, %v882
            %v888 = vsel %vm887, %v879, 0.0
            %889 = vadd.xlane.f32.xlu0 %v888
            %v890 = vpop.xlane.xlu0 %889
            %s891 = smov [#allocation23]
            %s892 = scalar_lea.vmem %s891, 24
            %893 = vst [vmem:[%s892] sm:$0xff] %v890
            %s894 = smov [#allocation22]
            %v895 = vld [vmem:[%s894] ss:$0 sm:$0xff]
            %v896 = vlaneseq
            %v897 = vand.u32 %v896, 127
            %v898 = vmov %v897
            %v899 = vlaneseq
            %v900 = vshrl.u32 %v899, 7
            %v901 = vmov %v900
            %vm903 = vcmp.eq.s32.totalorder %v901, %v898
            %v904 = vsel %vm903, %v895, 0.0
            %905 = vadd.xlane.f32.xlu0 %v904
            %v906 = vpop.xlane.xlu0 %905
            %s907 = smov [#allocation24]
            %908 = vst [vmem:[%s907] sm:$0xff] %v906
            %s909 = smov [#allocation22]
            %v910 = vld [vmem:[%s909] ss:$0 sm:$0xff]
            %v911 = vlaneseq
            %v912 = vand.u32 %v911, 127
            %v913 = vmov %v912
            %v914 = vlaneseq
            %v915 = vshrl.u32 %v914, 7
            %v916 = vmov %v915
            %v917 = vadd.s32 %v916, 8
            %vm918 = vcmp.eq.s32.totalorder %v917, %v913
            %v919 = vsel %vm918, %v910, 0.0
            %920 = vadd.xlane.f32.xlu0 %v919
            %v921 = vpop.xlane.xlu0 %920
            %s922 = smov [#allocation24]
            %s923 = scalar_lea.vmem %s922, 8
            %924 = vst [vmem:[%s923] sm:$0xff] %v921
            %s925 = smov [#allocation22]
            %v926 = vld [vmem:[%s925] ss:$0 sm:$0xff]
            %v927 = vlaneseq
            %v928 = vand.u32 %v927, 127
            %v929 = vmov %v928
            %v930 = vlaneseq
            %v931 = vshrl.u32 %v930, 7
            %v932 = vmov %v931
            %v933 = vadd.s32 %v932, 16
            %vm934 = vcmp.eq.s32.totalorder %v933, %v929
            %v935 = vsel %vm934, %v926, 0.0
            %936 = vadd.xlane.f32.xlu0 %v935
            %v937 = vpop.xlane.xlu0 %936
            %s938 = smov [#allocation24]
            %s939 = scalar_lea.vmem %s938, 16
            %940 = vst [vmem:[%s939] sm:$0xff] %v937
            %s941 = smov [#allocation22]
            %v942 = vld [vmem:[%s941] ss:$0 sm:$0xff]
            %v943 = vlaneseq
            %v944 = vand.u32 %v943, 127
            %v945 = vmov %v944
            %v946 = vlaneseq
            %v947 = vshrl.u32 %v946, 7
            %v948 = vmov %v947
            %v949 = vadd.s32 %v948, 24
            %vm950 = vcmp.eq.s32.totalorder %v949, %v945
            %v951 = vsel %vm950, %v942, 0.0
            %952 = vadd.xlane.f32.xlu0 %v951
            %v953 = vpop.xlane.xlu0 %952
            %s954 = smov [#allocation24]
            %s955 = scalar_lea.vmem %s954, 24
            %956 = vst [vmem:[%s955] sm:$0xff] %v953
            %s957 = smov [#allocation23]
            %v958 = vld [vmem:[%s957] sm:$0xff]
            %s959 = smov [#allocation24]
            %v960 = vld [vmem:[%s959] sm:$0xff]
            %s961 = smov [#allocation12]
            %s962 = smov [#allocation13]
            %s963 = smov [#allocation14]
            %s964 = smov [#allocation15]
            %v965 = vld [vmem:[%s961] sm:$0xff]
            %v966 = vld [vmem:[%s962] sm:$0xff]
            %v967 = vld [vmem:[%s963] sm:$0xff]
            %v968 = vld [vmem:[%s964] sm:$0xff]
            %v969 = vmul.f32 %v958, %v965
            %v970 = vmul.f32 %v960, %v967
            %v971 = vsub.f32 %v969, %v970
            %v972 = vmul.f32 %v958, %v966
            %v973 = vmul.f32 %v960, %v968
            %v974 = vsub.f32 %v972, %v973
            %v975 = vmul.f32 %v960, %v965
            %v976 = vmul.f32 %v958, %v967
            %v977 = vadd.f32 %v975, %v976
            %v978 = vmul.f32 %v960, %v966
            %v979 = vmul.f32 %v958, %v968
            %v980 = vadd.f32 %v978, %v979
            %981 = vst [vmem:[%s961] sm:$0xff] %v971
            %982 = vst [vmem:[%s962] sm:$0xff] %v974
            %983 = vst [vmem:[%s963] sm:$0xff] %v977
            %984 = vst [vmem:[%s964] sm:$0xff] %v980
            %s985 = smov [#allocation23]
            %s986 = scalar_lea.vmem %s985, 8
            %v987 = vld [vmem:[%s986] sm:$0xff]
            %s988 = smov [#allocation24]
            %s989 = scalar_lea.vmem %s988, 8
            %v990 = vld [vmem:[%s989] sm:$0xff]
            %s991 = smov [#allocation12]
            %s992 = scalar_lea.vmem %s991, 8
            %s993 = smov [#allocation13]
            %s994 = scalar_lea.vmem %s993, 8
            %s995 = smov [#allocation14]
            %s996 = scalar_lea.vmem %s995, 8
            %s997 = smov [#allocation15]
            %s998 = scalar_lea.vmem %s997, 8
            %v999 = vld [vmem:[%s992] sm:$0xff]
            %v1000 = vld [vmem:[%s994] sm:$0xff]
            %v1001 = vld [vmem:[%s996] sm:$0xff]
            %v1002 = vld [vmem:[%s998] sm:$0xff]
            %v1003 = vmul.f32 %v987, %v999
            %v1004 = vmul.f32 %v990, %v1001
            %v1005 = vsub.f32 %v1003, %v1004
            %v1006 = vmul.f32 %v987, %v1000
            %v1007 = vmul.f32 %v990, %v1002
            %v1008 = vsub.f32 %v1006, %v1007
            %v1009 = vmul.f32 %v990, %v999
            %v1010 = vmul.f32 %v987, %v1001
            %v1011 = vadd.f32 %v1009, %v1010
            %v1012 = vmul.f32 %v990, %v1000
            %v1013 = vmul.f32 %v987, %v1002
            %v1014 = vadd.f32 %v1012, %v1013
            %1015 = vst [vmem:[%s992] sm:$0xff] %v1005
            %1016 = vst [vmem:[%s994] sm:$0xff] %v1008
            %1017 = vst [vmem:[%s996] sm:$0xff] %v1011
            %1018 = vst [vmem:[%s998] sm:$0xff] %v1014
            %s1019 = smov [#allocation23]
            %s1020 = scalar_lea.vmem %s1019, 16
            %v1021 = vld [vmem:[%s1020] sm:$0xff]
            %s1022 = smov [#allocation24]
            %s1023 = scalar_lea.vmem %s1022, 16
            %v1024 = vld [vmem:[%s1023] sm:$0xff]
            %s1025 = smov [#allocation12]
            %s1026 = scalar_lea.vmem %s1025, 16
            %s1027 = smov [#allocation13]
            %s1028 = scalar_lea.vmem %s1027, 16
            %s1029 = smov [#allocation14]
            %s1030 = scalar_lea.vmem %s1029, 16
            %s1031 = smov [#allocation15]
            %s1032 = scalar_lea.vmem %s1031, 16
            %v1033 = vld [vmem:[%s1026] sm:$0xff]
            %v1034 = vld [vmem:[%s1028] sm:$0xff]
            %v1035 = vld [vmem:[%s1030] sm:$0xff]
            %v1036 = vld [vmem:[%s1032] sm:$0xff]
            %v1037 = vmul.f32 %v1021, %v1033
            %v1038 = vmul.f32 %v1024, %v1035
            %v1039 = vsub.f32 %v1037, %v1038
            %v1040 = vmul.f32 %v1021, %v1034
            %v1041 = vmul.f32 %v1024, %v1036
            %v1042 = vsub.f32 %v1040, %v1041
            %v1043 = vmul.f32 %v1024, %v1033
            %v1044 = vmul.f32 %v1021, %v1035
            %v1045 = vadd.f32 %v1043, %v1044
            %v1046 = vmul.f32 %v1024, %v1034
            %v1047 = vmul.f32 %v1021, %v1036
            %v1048 = vadd.f32 %v1046, %v1047
            %1049 = vst [vmem:[%s1026] sm:$0xff] %v1039
            %1050 = vst [vmem:[%s1028] sm:$0xff] %v1042
            %1051 = vst [vmem:[%s1030] sm:$0xff] %v1045
            %1052 = vst [vmem:[%s1032] sm:$0xff] %v1048
            %s1053 = smov [#allocation23]
            %s1054 = scalar_lea.vmem %s1053, 24
            %v1055 = vld [vmem:[%s1054] sm:$0xff]
            %s1056 = smov [#allocation24]
            %s1057 = scalar_lea.vmem %s1056, 24
            %v1058 = vld [vmem:[%s1057] sm:$0xff]
            %s1059 = smov [#allocation12]
            %s1060 = scalar_lea.vmem %s1059, 24
            %s1061 = smov [#allocation13]
            %s1062 = scalar_lea.vmem %s1061, 24
            %s1063 = smov [#allocation14]
            %s1064 = scalar_lea.vmem %s1063, 24
            %s1065 = smov [#allocation15]
            %s1066 = scalar_lea.vmem %s1065, 24
            %v1067 = vld [vmem:[%s1060] sm:$0xff]
            %v1068 = vld [vmem:[%s1062] sm:$0xff]
            %v1069 = vld [vmem:[%s1064] sm:$0xff]
            %v1070 = vld [vmem:[%s1066] sm:$0xff]
            %v1071 = vmul.f32 %v1055, %v1067
            %v1072 = vmul.f32 %v1058, %v1069
            %v1073 = vsub.f32 %v1071, %v1072
            %v1074 = vmul.f32 %v1055, %v1068
            %v1075 = vmul.f32 %v1058, %v1070
            %v1076 = vsub.f32 %v1074, %v1075
            %v1077 = vmul.f32 %v1058, %v1067
            %v1078 = vmul.f32 %v1055, %v1069
            %v1079 = vadd.f32 %v1077, %v1078
            %v1080 = vmul.f32 %v1058, %v1068
            %v1081 = vmul.f32 %v1055, %v1070
            %v1082 = vadd.f32 %v1080, %v1081
            %1083 = vst [vmem:[%s1060] sm:$0xff] %v1073
            %1084 = vst [vmem:[%s1062] sm:$0xff] %v1076
            %1085 = vst [vmem:[%s1064] sm:$0xff] %v1079
            %1086 = vst [vmem:[%s1066] sm:$0xff] %v1082
            %s1087 = smov [#allocation21]
            %v1088 = vld [vmem:[%s1087] ss:$0 sm:$0xff]
            %s1089 = smov [#allocation22]
            %v1090 = vld [vmem:[%s1089] ss:$0 sm:$0xff]
            %s1091 = smov [#allocation12]
            %s1092 = smov [#allocation13]
            %s1093 = smov [#allocation14]
            %s1094 = smov [#allocation15]
            %v1095 = vld [vmem:[%s1091] sm:$0xff]
            %v1096 = vld [vmem:[%s1092] sm:$0xff]
            %v1097 = vld [vmem:[%s1093] sm:$0xff]
            %v1098 = vld [vmem:[%s1094] sm:$0xff]
            %v1099 = vmul.f32 %v1088, %v1095
            %v1100 = vmul.f32 %v1090, %v1096
            %v1101 = vsub.f32 %v1099, %v1100
            %v1102 = vmul.f32 %v1090, %v1095
            %v1103 = vmul.f32 %v1088, %v1096
            %v1104 = vadd.f32 %v1102, %v1103
            %v1105 = vmul.f32 %v1088, %v1097
            %v1106 = vmul.f32 %v1090, %v1098
            %v1107 = vsub.f32 %v1105, %v1106
            %v1108 = vmul.f32 %v1090, %v1097
            %v1109 = vmul.f32 %v1088, %v1098
            %v1110 = vadd.f32 %v1108, %v1109
            %1111 = vst [vmem:[%s1091] sm:$0xff] %v1101
            %1112 = vst [vmem:[%s1092] sm:$0xff] %v1104
            %1113 = vst [vmem:[%s1093] sm:$0xff] %v1107
            %1114 = vst [vmem:[%s1094] sm:$0xff] %v1110
            %s1115 = smov [#allocation12]
            %s1116 = scalar_lea.vmem %s1115, 8
            %s1117 = smov [#allocation13]
            %s1118 = scalar_lea.vmem %s1117, 8
            %s1119 = smov [#allocation14]
            %s1120 = scalar_lea.vmem %s1119, 8
            %s1121 = smov [#allocation15]
            %s1122 = scalar_lea.vmem %s1121, 8
            %v1123 = vld [vmem:[%s1116] sm:$0xff]
            %v1124 = vld [vmem:[%s1118] sm:$0xff]
            %v1125 = vld [vmem:[%s1120] sm:$0xff]
            %v1126 = vld [vmem:[%s1122] sm:$0xff]
            %v1127 = vmul.f32 %v1088, %v1123
            %v1128 = vmul.f32 %v1090, %v1124
            %v1129 = vsub.f32 %v1127, %v1128
            %v1130 = vmul.f32 %v1090, %v1123
            %v1131 = vmul.f32 %v1088, %v1124
            %v1132 = vadd.f32 %v1130, %v1131
            %v1133 = vmul.f32 %v1088, %v1125
            %v1134 = vmul.f32 %v1090, %v1126
            %v1135 = vsub.f32 %v1133, %v1134
            %v1136 = vmul.f32 %v1090, %v1125
            %v1137 = vmul.f32 %v1088, %v1126
            %v1138 = vadd.f32 %v1136, %v1137
            %1139 = vst [vmem:[%s1116] sm:$0xff] %v1129
            %1140 = vst [vmem:[%s1118] sm:$0xff] %v1132
            %1141 = vst [vmem:[%s1120] sm:$0xff] %v1135
            %1142 = vst [vmem:[%s1122] sm:$0xff] %v1138
            %s1143 = smov [#allocation12]
            %s1144 = scalar_lea.vmem %s1143, 16
            %s1145 = smov [#allocation13]
            %s1146 = scalar_lea.vmem %s1145, 16
            %s1147 = smov [#allocation14]
            %s1148 = scalar_lea.vmem %s1147, 16
            %s1149 = smov [#allocation15]
            %s1150 = scalar_lea.vmem %s1149, 16
            %v1151 = vld [vmem:[%s1144] sm:$0xff]
            %v1152 = vld [vmem:[%s1146] sm:$0xff]
            %v1153 = vld [vmem:[%s1148] sm:$0xff]
            %v1154 = vld [vmem:[%s1150] sm:$0xff]
            %v1155 = vmul.f32 %v1088, %v1151
            %v1156 = vmul.f32 %v1090, %v1152
            %v1157 = vsub.f32 %v1155, %v1156
            %v1158 = vmul.f32 %v1090, %v1151
            %v1159 = vmul.f32 %v1088, %v1152
            %v1160 = vadd.f32 %v1158, %v1159
            %v1161 = vmul.f32 %v1088, %v1153
            %v1162 = vmul.f32 %v1090, %v1154
            %v1163 = vsub.f32 %v1161, %v1162
            %v1164 = vmul.f32 %v1090, %v1153
            %v1165 = vmul.f32 %v1088, %v1154
            %v1166 = vadd.f32 %v1164, %v1165
            %1167 = vst [vmem:[%s1144] sm:$0xff] %v1157
            %1168 = vst [vmem:[%s1146] sm:$0xff] %v1160
            %1169 = vst [vmem:[%s1148] sm:$0xff] %v1163
            %1170 = vst [vmem:[%s1150] sm:$0xff] %v1166
            %s1171 = smov [#allocation12]
            %s1172 = scalar_lea.vmem %s1171, 24
            %s1173 = smov [#allocation13]
            %s1174 = scalar_lea.vmem %s1173, 24
            %s1175 = smov [#allocation14]
            %s1176 = scalar_lea.vmem %s1175, 24
            %s1177 = smov [#allocation15]
            %s1178 = scalar_lea.vmem %s1177, 24
            %v1179 = vld [vmem:[%s1172] sm:$0xff]
            %v1180 = vld [vmem:[%s1174] sm:$0xff]
            %v1181 = vld [vmem:[%s1176] sm:$0xff]
            %v1182 = vld [vmem:[%s1178] sm:$0xff]
            %v1183 = vmul.f32 %v1088, %v1179
            %v1184 = vmul.f32 %v1090, %v1180
            %v1185 = vsub.f32 %v1183, %v1184
            %v1186 = vmul.f32 %v1090, %v1179
            %v1187 = vmul.f32 %v1088, %v1180
            %v1188 = vadd.f32 %v1186, %v1187
            %v1189 = vmul.f32 %v1088, %v1181
            %v1190 = vmul.f32 %v1090, %v1182
            %v1191 = vsub.f32 %v1189, %v1190
            %v1192 = vmul.f32 %v1090, %v1181
            %v1193 = vmul.f32 %v1088, %v1182
            %v1194 = vadd.f32 %v1192, %v1193
            %1195 = vst [vmem:[%s1172] sm:$0xff] %v1185
            %1196 = vst [vmem:[%s1174] sm:$0xff] %v1188
            %1197 = vst [vmem:[%s1176] sm:$0xff] %v1191
            %1198 = vst [vmem:[%s1178] sm:$0xff] %v1194
            %s1199 = smov [#allocation12]
            %s1200 = smov [#allocation19]
            %v1201 = vlaneseq
            %v1202 = vand.u32 %v1201, 127
            %v1203 = vmov %v1202
            %v1204 = vlaneseq
            %v1205 = vshrl.u32 %v1204, 7
            %v1206 = vmov %v1205
            %v1207 = vld [vmem:[%s1200] ss:$0 sm:$0xff]
            %v1208 = vld [vmem:[%s1199] sm:$0xff]
            %vm1211 = vcmp.eq.s32.totalorder %v1206, %v1203
            %v1212 = vsel %vm1211, %v1207, %v1208
            %1213 = vst [vmem:[%s1199] sm:$0xff] %v1212
            %v1214 = vld [vmem:[%s1200] ss:$0 sm:$0xff]
            %s1215 = scalar_lea.vmem %s1199, 8
            %v1216 = vld [vmem:[%s1215] sm:$0xff]
            %v1218 = vadd.s32 %v1206, 8
            %vm1219 = vcmp.eq.s32.totalorder %v1218, %v1203
            %v1220 = vsel %vm1219, %v1214, %v1216
            %1221 = vst [vmem:[%s1215] sm:$0xff] %v1220
            %v1222 = vld [vmem:[%s1200] ss:$0 sm:$0xff]
            %s1223 = scalar_lea.vmem %s1199, 16
            %v1224 = vld [vmem:[%s1223] sm:$0xff]
            %v1226 = vadd.s32 %v1206, 16
            %vm1227 = vcmp.eq.s32.totalorder %v1226, %v1203
            %v1228 = vsel %vm1227, %v1222, %v1224
            %1229 = vst [vmem:[%s1223] sm:$0xff] %v1228
            %v1230 = vld [vmem:[%s1200] ss:$0 sm:$0xff]
            %s1231 = scalar_lea.vmem %s1199, 24
            %v1232 = vld [vmem:[%s1231] sm:$0xff]
            %v1234 = vadd.s32 %v1206, 24
            %vm1235 = vcmp.eq.s32.totalorder %v1234, %v1203
            %v1236 = vsel %vm1235, %v1230, %v1232
            %1237 = vst [vmem:[%s1231] sm:$0xff] %v1236
            %s1238 = smov [#allocation13]
            %v1239 = vlaneseq
            %v1240 = vand.u32 %v1239, 127
            %v1241 = vmov %v1240
            %v1242 = vlaneseq
            %v1243 = vshrl.u32 %v1242, 7
            %v1244 = vmov %v1243
            %v1245 = vld [vmem:[%s1238] sm:$0xff]
            %vm1248 = vcmp.eq.s32.totalorder %v1244, %v1241
            %v1249 = vsel %vm1248, 0.0, %v1245
            %1250 = vst [vmem:[%s1238] sm:$0xff] %v1249
            %s1251 = scalar_lea.vmem %s1238, 8
            %v1252 = vld [vmem:[%s1251] sm:$0xff]
            %v1254 = vadd.s32 %v1244, 8
            %vm1255 = vcmp.eq.s32.totalorder %v1254, %v1241
            %v1256 = vsel %vm1255, 0.0, %v1252
            %1257 = vst [vmem:[%s1251] sm:$0xff] %v1256
            %s1258 = scalar_lea.vmem %s1238, 16
            %v1259 = vld [vmem:[%s1258] sm:$0xff]
            %v1261 = vadd.s32 %v1244, 16
            %vm1262 = vcmp.eq.s32.totalorder %v1261, %v1241
            %v1263 = vsel %vm1262, 0.0, %v1259
            %1264 = vst [vmem:[%s1258] sm:$0xff] %v1263
            %s1265 = scalar_lea.vmem %s1238, 24
            %v1266 = vld [vmem:[%s1265] sm:$0xff]
            %v1268 = vadd.s32 %v1244, 24
            %vm1269 = vcmp.eq.s32.totalorder %v1268, %v1241
            %v1270 = vsel %vm1269, 0.0, %v1266
            %1271 = vst [vmem:[%s1265] sm:$0xff] %v1270
            %s1272 = smov [#allocation14]
            %v1273 = vlaneseq
            %v1274 = vand.u32 %v1273, 127
            %v1275 = vmov %v1274
            %v1276 = vlaneseq
            %v1277 = vshrl.u32 %v1276, 7
            %v1278 = vmov %v1277
            %v1279 = vld [vmem:[%s1272] sm:$0xff]
            %vm1282 = vcmp.eq.s32.totalorder %v1278, %v1275
            %v1283 = vsel %vm1282, 0.0, %v1279
            %1284 = vst [vmem:[%s1272] sm:$0xff] %v1283
            %s1285 = scalar_lea.vmem %s1272, 8
            %v1286 = vld [vmem:[%s1285] sm:$0xff]
            %v1288 = vadd.s32 %v1278, 8
            %vm1289 = vcmp.eq.s32.totalorder %v1288, %v1275
            %v1290 = vsel %vm1289, 0.0, %v1286
            %1291 = vst [vmem:[%s1285] sm:$0xff] %v1290
            %s1292 = scalar_lea.vmem %s1272, 16
            %v1293 = vld [vmem:[%s1292] sm:$0xff]
            %v1295 = vadd.s32 %v1278, 16
            %vm1296 = vcmp.eq.s32.totalorder %v1295, %v1275
            %v1297 = vsel %vm1296, 0.0, %v1293
            %1298 = vst [vmem:[%s1292] sm:$0xff] %v1297
            %s1299 = scalar_lea.vmem %s1272, 24
            %v1300 = vld [vmem:[%s1299] sm:$0xff]
            %v1302 = vadd.s32 %v1278, 24
            %vm1303 = vcmp.eq.s32.totalorder %v1302, %v1275
            %v1304 = vsel %vm1303, 0.0, %v1300
            %1305 = vst [vmem:[%s1299] sm:$0xff] %v1304
            %s1306 = smov [#allocation15]
            %s1307 = smov [#allocation20]
            %v1308 = vlaneseq
            %v1309 = vand.u32 %v1308, 127
            %v1310 = vmov %v1309
            %v1311 = vlaneseq
            %v1312 = vshrl.u32 %v1311, 7
            %v1313 = vmov %v1312
            %v1314 = vld [vmem:[%s1307] ss:$0 sm:$0xff]
            %v1315 = vld [vmem:[%s1306] sm:$0xff]
            %vm1318 = vcmp.eq.s32.totalorder %v1313, %v1310
            %v1319 = vsel %vm1318, %v1314, %v1315
            %1320 = vst [vmem:[%s1306] sm:$0xff] %v1319
            %v1321 = vld [vmem:[%s1307] ss:$0 sm:$0xff]
            %s1322 = scalar_lea.vmem %s1306, 8
            %v1323 = vld [vmem:[%s1322] sm:$0xff]
            %v1325 = vadd.s32 %v1313, 8
            %vm1326 = vcmp.eq.s32.totalorder %v1325, %v1310
            %v1327 = vsel %vm1326, %v1321, %v1323
            %1328 = vst [vmem:[%s1322] sm:$0xff] %v1327
            %v1329 = vld [vmem:[%s1307] ss:$0 sm:$0xff]
            %s1330 = scalar_lea.vmem %s1306, 16
            %v1331 = vld [vmem:[%s1330] sm:$0xff]
            %v1333 = vadd.s32 %v1313, 16
            %vm1334 = vcmp.eq.s32.totalorder %v1333, %v1310
            %v1335 = vsel %vm1334, %v1329, %v1331
            %1336 = vst [vmem:[%s1330] sm:$0xff] %v1335
            %v1337 = vld [vmem:[%s1307] ss:$0 sm:$0xff]
            %s1338 = scalar_lea.vmem %s1306, 24
            %v1339 = vld [vmem:[%s1338] sm:$0xff]
            %v1341 = vadd.s32 %v1313, 24
            %vm1342 = vcmp.eq.s32.totalorder %v1341, %v1310
            %v1343 = vsel %vm1342, %v1337, %v1339
            %1344 = vst [vmem:[%s1338] sm:$0xff] %v1343
            %s1345 = smov [#allocation12]
            %s1346 = smov [#allocation13]
            %v1347 = vld [vmem:[%s1346] sm:$0xff]
            %1348 = vrot.lane.b32.xlu0 %v1347, 1
            %v1349 = vpop.permute.xlu0 %1348
            %v1350 = vld [vmem:[%s1345] sm:$0xff]
            %v1351 = vld [vmem:[%s1345] sm:$0xff]
            %1352 = vrot.lane.b32.xlu0 %v1351, 1
            %v1353 = vpop.permute.xlu0 %1352
            %v1354 = vlaneseq
            %v1355 = vand.u32 %v1354, 127
            %vm1356 = vcmp.eq.s32.totalorder %v1355, 0
            %v1357 = vsel %vm1356, %v1351, %v1353
            %v1358 = vlaneseq
            %v1359 = vand.u32 %v1358, 127
            %vm1360 = vcmp.eq.s32.totalorder %v1359, 1
            %v1361 = vsel %vm1360, %v1349, %v1357
            %v1362 = vlaneseq
            %v1363 = vand.u32 %v1362, 127
            %vm1364 = vcmp.ge.s32.totalorder %v1363, 0
            %vm1365 = vcmp.lt.s32.totalorder %v1363, 32
            %vm1366 = vmand %vm1364, %vm1365
            %v1367 = vsel %vm1366, %v1361, 0.0
            %v1368 = vld [vmem:[%s1346] sm:$0xff]
            %1369 = vrot.lane.b32.xlu0 %v1368, 127
            %v1370 = vpop.permute.xlu0 %1369
            %v1371 = vlaneseq
            %v1372 = vand.u32 %v1371, 127
            %vm1373 = vcmp.eq.s32.totalorder %v1372, 31
            %v1374 = vsel %vm1373, %v1350, %v1370
            %s1375 = smov [#allocation12]
            %s1376 = scalar_lea.vmem %s1375, 8
            %s1377 = smov [#allocation13]
            %s1378 = scalar_lea.vmem %s1377, 8
            %v1379 = vld [vmem:[%s1378] sm:$0xff]
            %1380 = vrot.lane.b32.xlu0 %v1379, 1
            %v1381 = vpop.permute.xlu0 %1380
            %v1382 = vld [vmem:[%s1376] sm:$0xff]
            %v1383 = vld [vmem:[%s1376] sm:$0xff]
            %1384 = vrot.lane.b32.xlu0 %v1383, 1
            %v1385 = vpop.permute.xlu0 %1384
            %v1386 = vlaneseq
            %v1387 = vand.u32 %v1386, 127
            %vm1388 = vcmp.eq.s32.totalorder %v1387, 0
            %v1389 = vsel %vm1388, %v1383, %v1385
            %v1390 = vlaneseq
            %v1391 = vand.u32 %v1390, 127
            %vm1392 = vcmp.eq.s32.totalorder %v1391, 1
            %v1393 = vsel %vm1392, %v1381, %v1389
            %v1394 = vlaneseq
            %v1395 = vand.u32 %v1394, 127
            %vm1396 = vcmp.ge.s32.totalorder %v1395, 0
            %vm1397 = vcmp.lt.s32.totalorder %v1395, 32
            %vm1398 = vmand %vm1396, %vm1397
            %v1399 = vsel %vm1398, %v1393, 0.0
            %v1400 = vld [vmem:[%s1378] sm:$0xff]
            %1401 = vrot.lane.b32.xlu0 %v1400, 127
            %v1402 = vpop.permute.xlu0 %1401
            %v1403 = vlaneseq
            %v1404 = vand.u32 %v1403, 127
            %vm1405 = vcmp.eq.s32.totalorder %v1404, 31
            %v1406 = vsel %vm1405, %v1382, %v1402
            %s1407 = smov [#allocation12]
            %s1408 = scalar_lea.vmem %s1407, 16
            %s1409 = smov [#allocation13]
            %s1410 = scalar_lea.vmem %s1409, 16
            %v1411 = vld [vmem:[%s1410] sm:$0xff]
            %1412 = vrot.lane.b32.xlu0 %v1411, 1
            %v1413 = vpop.permute.xlu0 %1412
            %v1414 = vld [vmem:[%s1408] sm:$0xff]
            %v1415 = vld [vmem:[%s1408] sm:$0xff]
            %1416 = vrot.lane.b32.xlu0 %v1415, 1
            %v1417 = vpop.permute.xlu0 %1416
            %v1418 = vlaneseq
            %v1419 = vand.u32 %v1418, 127
            %vm1420 = vcmp.eq.s32.totalorder %v1419, 0
            %v1421 = vsel %vm1420, %v1415, %v1417
            %v1422 = vlaneseq
            %v1423 = vand.u32 %v1422, 127
            %vm1424 = vcmp.eq.s32.totalorder %v1423, 1
            %v1425 = vsel %vm1424, %v1413, %v1421
            %v1426 = vlaneseq
            %v1427 = vand.u32 %v1426, 127
            %vm1428 = vcmp.ge.s32.totalorder %v1427, 0
            %vm1429 = vcmp.lt.s32.totalorder %v1427, 32
            %vm1430 = vmand %vm1428, %vm1429
            %v1431 = vsel %vm1430, %v1425, 0.0
            %v1432 = vld [vmem:[%s1410] sm:$0xff]
            %1433 = vrot.lane.b32.xlu0 %v1432, 127
            %v1434 = vpop.permute.xlu0 %1433
            %v1435 = vlaneseq
            %v1436 = vand.u32 %v1435, 127
            %vm1437 = vcmp.eq.s32.totalorder %v1436, 31
            %v1438 = vsel %vm1437, %v1414, %v1434
            %s1439 = smov [#allocation12]
            %s1440 = scalar_lea.vmem %s1439, 24
            %s1441 = smov [#allocation13]
            %s1442 = scalar_lea.vmem %s1441, 24
            %v1443 = vld [vmem:[%s1442] sm:$0xff]
            %1444 = vrot.lane.b32.xlu0 %v1443, 1
            %v1445 = vpop.permute.xlu0 %1444
            %v1446 = vld [vmem:[%s1440] sm:$0xff]
            %v1447 = vld [vmem:[%s1440] sm:$0xff]
            %1448 = vrot.lane.b32.xlu0 %v1447, 1
            %v1449 = vpop.permute.xlu0 %1448
            %v1450 = vlaneseq
            %v1451 = vand.u32 %v1450, 127
            %vm1452 = vcmp.eq.s32.totalorder %v1451, 0
            %v1453 = vsel %vm1452, %v1447, %v1449
            %v1454 = vlaneseq
            %v1455 = vand.u32 %v1454, 127
            %vm1456 = vcmp.eq.s32.totalorder %v1455, 1
            %v1457 = vsel %vm1456, %v1445, %v1453
            %v1458 = vlaneseq
            %v1459 = vand.u32 %v1458, 127
            %vm1460 = vcmp.ge.s32.totalorder %v1459, 0
            %vm1461 = vcmp.lt.s32.totalorder %v1459, 32
            %vm1462 = vmand %vm1460, %vm1461
            %v1463 = vsel %vm1462, %v1457, 0.0
            %v1464 = vld [vmem:[%s1442] sm:$0xff]
            %1465 = vrot.lane.b32.xlu0 %v1464, 127
            %v1466 = vpop.permute.xlu0 %1465
            %v1467 = vlaneseq
            %v1468 = vand.u32 %v1467, 127
            %vm1469 = vcmp.eq.s32.totalorder %v1468, 31
            %v1470 = vsel %vm1469, %v1446, %v1466
            %1471 = vst [vmem:[%s1345] sm:$0xff] %v1367
            %1472 = vst [vmem:[%s1346] sm:$0xff] %v1374
            %1473 = vst [vmem:[%s1376] sm:$0xff] %v1399
            %1474 = vst [vmem:[%s1378] sm:$0xff] %v1406
            %1475 = vst [vmem:[%s1408] sm:$0xff] %v1431
            %1476 = vst [vmem:[%s1410] sm:$0xff] %v1438
            %1477 = vst [vmem:[%s1440] sm:$0xff] %v1463
            %1478 = vst [vmem:[%s1442] sm:$0xff] %v1470
            %s1479 = smov [#allocation14]
            %s1480 = smov [#allocation15]
            %v1481 = vld [vmem:[%s1480] sm:$0xff]
            %1482 = vrot.lane.b32.xlu0 %v1481, 1
            %v1483 = vpop.permute.xlu0 %1482
            %v1484 = vld [vmem:[%s1479] sm:$0xff]
            %v1485 = vld [vmem:[%s1479] sm:$0xff]
            %1486 = vrot.lane.b32.xlu0 %v1485, 1
            %v1487 = vpop.permute.xlu0 %1486
            %v1488 = vlaneseq
            %v1489 = vand.u32 %v1488, 127
            %vm1490 = vcmp.eq.s32.totalorder %v1489, 0
            %v1491 = vsel %vm1490, %v1485, %v1487
            %v1492 = vlaneseq
            %v1493 = vand.u32 %v1492, 127
            %vm1494 = vcmp.eq.s32.totalorder %v1493, 1
            %v1495 = vsel %vm1494, %v1483, %v1491
            %v1496 = vlaneseq
            %v1497 = vand.u32 %v1496, 127
            %vm1498 = vcmp.ge.s32.totalorder %v1497, 0
            %vm1499 = vcmp.lt.s32.totalorder %v1497, 32
            %vm1500 = vmand %vm1498, %vm1499
            %v1501 = vsel %vm1500, %v1495, 0.0
            %v1502 = vld [vmem:[%s1480] sm:$0xff]
            %1503 = vrot.lane.b32.xlu0 %v1502, 127
            %v1504 = vpop.permute.xlu0 %1503
            %v1505 = vlaneseq
            %v1506 = vand.u32 %v1505, 127
            %vm1507 = vcmp.eq.s32.totalorder %v1506, 31
            %v1508 = vsel %vm1507, %v1484, %v1504
            %s1509 = smov [#allocation14]
            %s1510 = scalar_lea.vmem %s1509, 8
            %s1511 = smov [#allocation15]
            %s1512 = scalar_lea.vmem %s1511, 8
            %v1513 = vld [vmem:[%s1512] sm:$0xff]
            %1514 = vrot.lane.b32.xlu0 %v1513, 1
            %v1515 = vpop.permute.xlu0 %1514
            %v1516 = vld [vmem:[%s1510] sm:$0xff]
            %v1517 = vld [vmem:[%s1510] sm:$0xff]
            %1518 = vrot.lane.b32.xlu0 %v1517, 1
            %v1519 = vpop.permute.xlu0 %1518
            %v1520 = vlaneseq
            %v1521 = vand.u32 %v1520, 127
            %vm1522 = vcmp.eq.s32.totalorder %v1521, 0
            %v1523 = vsel %vm1522, %v1517, %v1519
            %v1524 = vlaneseq
            %v1525 = vand.u32 %v1524, 127
            %vm1526 = vcmp.eq.s32.totalorder %v1525, 1
            %v1527 = vsel %vm1526, %v1515, %v1523
            %v1528 = vlaneseq
            %v1529 = vand.u32 %v1528, 127
            %vm1530 = vcmp.ge.s32.totalorder %v1529, 0
            %vm1531 = vcmp.lt.s32.totalorder %v1529, 32
            %vm1532 = vmand %vm1530, %vm1531
            %v1533 = vsel %vm1532, %v1527, 0.0
            %v1534 = vld [vmem:[%s1512] sm:$0xff]
            %1535 = vrot.lane.b32.xlu0 %v1534, 127
            %v1536 = vpop.permute.xlu0 %1535
            %v1537 = vlaneseq
            %v1538 = vand.u32 %v1537, 127
            %vm1539 = vcmp.eq.s32.totalorder %v1538, 31
            %v1540 = vsel %vm1539, %v1516, %v1536
            %s1541 = smov [#allocation14]
            %s1542 = scalar_lea.vmem %s1541, 16
            %s1543 = smov [#allocation15]
            %s1544 = scalar_lea.vmem %s1543, 16
            %v1545 = vld [vmem:[%s1544] sm:$0xff]
            %1546 = vrot.lane.b32.xlu0 %v1545, 1
            %v1547 = vpop.permute.xlu0 %1546
            %v1548 = vld [vmem:[%s1542] sm:$0xff]
            %v1549 = vld [vmem:[%s1542] sm:$0xff]
            %1550 = vrot.lane.b32.xlu0 %v1549, 1
            %v1551 = vpop.permute.xlu0 %1550
            %v1552 = vlaneseq
            %v1553 = vand.u32 %v1552, 127
            %vm1554 = vcmp.eq.s32.totalorder %v1553, 0
            %v1555 = vsel %vm1554, %v1549, %v1551
            %v1556 = vlaneseq
            %v1557 = vand.u32 %v1556, 127
            %vm1558 = vcmp.eq.s32.totalorder %v1557, 1
            %v1559 = vsel %vm1558, %v1547, %v1555
            %v1560 = vlaneseq
            %v1561 = vand.u32 %v1560, 127
            %vm1562 = vcmp.ge.s32.totalorder %v1561, 0
            %vm1563 = vcmp.lt.s32.totalorder %v1561, 32
            %vm1564 = vmand %vm1562, %vm1563
            %v1565 = vsel %vm1564, %v1559, 0.0
            %v1566 = vld [vmem:[%s1544] sm:$0xff]
            %1567 = vrot.lane.b32.xlu0 %v1566, 127
            %v1568 = vpop.permute.xlu0 %1567
            %v1569 = vlaneseq
            %v1570 = vand.u32 %v1569, 127
            %vm1571 = vcmp.eq.s32.totalorder %v1570, 31
            %v1572 = vsel %vm1571, %v1548, %v1568
            %s1573 = smov [#allocation14]
            %s1574 = scalar_lea.vmem %s1573, 24
            %s1575 = smov [#allocation15]
            %s1576 = scalar_lea.vmem %s1575, 24
            %v1577 = vld [vmem:[%s1576] sm:$0xff]
            %1578 = vrot.lane.b32.xlu0 %v1577, 1
            %v1579 = vpop.permute.xlu0 %1578
            %v1580 = vld [vmem:[%s1574] sm:$0xff]
            %v1581 = vld [vmem:[%s1574] sm:$0xff]
            %1582 = vrot.lane.b32.xlu0 %v1581, 1
            %v1583 = vpop.permute.xlu0 %1582
            %v1584 = vlaneseq
            %v1585 = vand.u32 %v1584, 127
            %vm1586 = vcmp.eq.s32.totalorder %v1585, 0
            %v1587 = vsel %vm1586, %v1581, %v1583
            %v1588 = vlaneseq
            %v1589 = vand.u32 %v1588, 127
            %vm1590 = vcmp.eq.s32.totalorder %v1589, 1
            %v1591 = vsel %vm1590, %v1579, %v1587
            %v1592 = vlaneseq
            %v1593 = vand.u32 %v1592, 127
            %vm1594 = vcmp.ge.s32.totalorder %v1593, 0
            %vm1595 = vcmp.lt.s32.totalorder %v1593, 32
            %vm1596 = vmand %vm1594, %vm1595
            %v1597 = vsel %vm1596, %v1591, 0.0
            %v1598 = vld [vmem:[%s1576] sm:$0xff]
            %1599 = vrot.lane.b32.xlu0 %v1598, 127
            %v1600 = vpop.permute.xlu0 %1599
            %v1601 = vlaneseq
            %v1602 = vand.u32 %v1601, 127
            %vm1603 = vcmp.eq.s32.totalorder %v1602, 31
            %v1604 = vsel %vm1603, %v1580, %v1600
            %1605 = vst [vmem:[%s1479] sm:$0xff] %v1501
            %1606 = vst [vmem:[%s1480] sm:$0xff] %v1508
            %1607 = vst [vmem:[%s1510] sm:$0xff] %v1533
            %1608 = vst [vmem:[%s1512] sm:$0xff] %v1540
            %1609 = vst [vmem:[%s1542] sm:$0xff] %v1565
            %1610 = vst [vmem:[%s1544] sm:$0xff] %v1572
            %1611 = vst [vmem:[%s1574] sm:$0xff] %v1597
            %1612 = vst [vmem:[%s1576] sm:$0xff] %v1604
            %s1613 = smov [#allocation12]
            %s1614 = smov [#allocation14]
            %v1615 = vld [vmem:[%s1613] ss:$0 sm:$0xff]
            %s1617 = scalar_lea.vmem %s1613, 4294967295
            %v1618 = vld [vmem:[%s1617] sm:$0xfe]
            %v1619 = vlaneseq
            %v1620 = vshrl.u32 %v1619, 7
            %vm1621 = vcmp.eq.s32.totalorder %v1620, 0
            %v1622 = vsel %vm1621, %v1615, %v1618
            %s1623 = scalar_lea.vmem %s1613, 7
            %v1624 = vld [vmem:[%s1623] ss:$0 sm:$0xff]
            %1625 = vst [vmem:[%s1613] sm:$0xff] %v1622
            %s1626 = scalar_lea.vmem %s1613, 8
            %s1628 = scalar_lea.vmem %s1626, 4294967295
            %v1629 = vld [vmem:[%s1628] sm:$0xfe]
            %v1630 = vlaneseq
            %v1631 = vshrl.u32 %v1630, 7
            %vm1632 = vcmp.eq.s32.totalorder %v1631, 0
            %v1633 = vsel %vm1632, %v1624, %v1629
            %s1634 = scalar_lea.vmem %s1626, 7
            %v1635 = vld [vmem:[%s1634] ss:$0 sm:$0xff]
            %1636 = vst [vmem:[%s1626] sm:$0xff] %v1633
            %s1637 = scalar_lea.vmem %s1613, 16
            %s1639 = scalar_lea.vmem %s1637, 4294967295
            %v1640 = vld [vmem:[%s1639] sm:$0xfe]
            %v1641 = vlaneseq
            %v1642 = vshrl.u32 %v1641, 7
            %vm1643 = vcmp.eq.s32.totalorder %v1642, 0
            %v1644 = vsel %vm1643, %v1635, %v1640
            %s1645 = scalar_lea.vmem %s1637, 7
            %v1646 = vld [vmem:[%s1645] ss:$0 sm:$0xff]
            %1647 = vst [vmem:[%s1637] sm:$0xff] %v1644
            %s1648 = scalar_lea.vmem %s1613, 24
            %s1650 = scalar_lea.vmem %s1648, 4294967295
            %v1651 = vld [vmem:[%s1650] sm:$0xfe]
            %v1652 = vlaneseq
            %v1653 = vshrl.u32 %v1652, 7
            %vm1654 = vcmp.eq.s32.totalorder %v1653, 0
            %v1655 = vsel %vm1654, %v1646, %v1651
            %s1656 = scalar_lea.vmem %s1648, 7
            %v1657 = vld [vmem:[%s1656] ss:$0 sm:$0xff]
            %1658 = vst [vmem:[%s1648] sm:$0xff] %v1655
            %v1659 = vld [vmem:[%s1614] ss:$0 sm:$0xff]
            %s1660 = scalar_lea.vmem %s1613, 1
            %1661 = vst [vmem:[%s1660] sm:$0x1] %v1659
            %s1662 = scalar_lea.vmem %s1614, 24
            %s1663 = scalar_lea.vmem %s1662, 1
            %v1664 = vld [vmem:[%s1663] sm:$0x7f]
            %v1665 = vlaneseq
            %v1666 = vshrl.u32 %v1665, 7
            %vm1667 = vcmp.eq.s32.totalorder %v1666, 7
            %v1668 = vsel %vm1667, %v1657, %v1664
            %v1669 = vld [vmem:[%s1662] ss:$0 sm:$0xff]
            %1670 = vst [vmem:[%s1662] sm:$0xff] %v1668
            %s1671 = scalar_lea.vmem %s1614, 16
            %s1672 = scalar_lea.vmem %s1671, 1
            %v1673 = vld [vmem:[%s1672] sm:$0x7f]
            %v1674 = vlaneseq
            %v1675 = vshrl.u32 %v1674, 7
            %vm1676 = vcmp.eq.s32.totalorder %v1675, 7
            %v1677 = vsel %vm1676, %v1669, %v1673
            %v1678 = vld [vmem:[%s1671] ss:$0 sm:$0xff]
            %1679 = vst [vmem:[%s1671] sm:$0xff] %v1677
            %s1680 = scalar_lea.vmem %s1614, 8
            %s1681 = scalar_lea.vmem %s1680, 1
            %v1682 = vld [vmem:[%s1681] sm:$0x7f]
            %v1683 = vlaneseq
            %v1684 = vshrl.u32 %v1683, 7
            %vm1685 = vcmp.eq.s32.totalorder %v1684, 7
            %v1686 = vsel %vm1685, %v1678, %v1682
            %v1687 = vld [vmem:[%s1680] ss:$0 sm:$0xff]
            %1688 = vst [vmem:[%s1680] sm:$0xff] %v1686
            %s1689 = scalar_lea.vmem %s1614, 1
            %v1690 = vld [vmem:[%s1689] sm:$0x7f]
            %v1691 = vlaneseq
            %v1692 = vshrl.u32 %v1691, 7
            %vm1693 = vcmp.eq.s32.totalorder %v1692, 7
            %v1694 = vsel %vm1693, %v1687, %v1690
            %v1695 = vld [vmem:[%s1614] ss:$0 sm:$0xff]
            %1696 = vst [vmem:[%s1614] sm:$0xff] %v1694
            %s1697 = smov [#allocation13]
            %s1698 = smov [#allocation15]
            %v1699 = vld [vmem:[%s1697] ss:$0 sm:$0xff]
            %s1701 = scalar_lea.vmem %s1697, 4294967295
            %v1702 = vld [vmem:[%s1701] sm:$0xfe]
            %v1703 = vlaneseq
            %v1704 = vshrl.u32 %v1703, 7
            %vm1705 = vcmp.eq.s32.totalorder %v1704, 0
            %v1706 = vsel %vm1705, %v1699, %v1702
            %s1707 = scalar_lea.vmem %s1697, 7
            %v1708 = vld [vmem:[%s1707] ss:$0 sm:$0xff]
            %1709 = vst [vmem:[%s1697] sm:$0xff] %v1706
            %s1710 = scalar_lea.vmem %s1697, 8
            %s1712 = scalar_lea.vmem %s1710, 4294967295
            %v1713 = vld [vmem:[%s1712] sm:$0xfe]
            %v1714 = vlaneseq
            %v1715 = vshrl.u32 %v1714, 7
            %vm1716 = vcmp.eq.s32.totalorder %v1715, 0
            %v1717 = vsel %vm1716, %v1708, %v1713
            %s1718 = scalar_lea.vmem %s1710, 7
            %v1719 = vld [vmem:[%s1718] ss:$0 sm:$0xff]
            %1720 = vst [vmem:[%s1710] sm:$0xff] %v1717
            %s1721 = scalar_lea.vmem %s1697, 16
            %s1723 = scalar_lea.vmem %s1721, 4294967295
            %v1724 = vld [vmem:[%s1723] sm:$0xfe]
            %v1725 = vlaneseq
            %v1726 = vshrl.u32 %v1725, 7
            %vm1727 = vcmp.eq.s32.totalorder %v1726, 0
            %v1728 = vsel %vm1727, %v1719, %v1724
            %s1729 = scalar_lea.vmem %s1721, 7
            %v1730 = vld [vmem:[%s1729] ss:$0 sm:$0xff]
            %1731 = vst [vmem:[%s1721] sm:$0xff] %v1728
            %s1732 = scalar_lea.vmem %s1697, 24
            %s1734 = scalar_lea.vmem %s1732, 4294967295
            %v1735 = vld [vmem:[%s1734] sm:$0xfe]
            %v1736 = vlaneseq
            %v1737 = vshrl.u32 %v1736, 7
            %vm1738 = vcmp.eq.s32.totalorder %v1737, 0
            %v1739 = vsel %vm1738, %v1730, %v1735
            %s1740 = scalar_lea.vmem %s1732, 7
            %v1741 = vld [vmem:[%s1740] ss:$0 sm:$0xff]
            %1742 = vst [vmem:[%s1732] sm:$0xff] %v1739
            %v1743 = vld [vmem:[%s1698] ss:$0 sm:$0xff]
            %s1744 = scalar_lea.vmem %s1697, 1
            %1745 = vst [vmem:[%s1744] sm:$0x1] %v1743
            %s1746 = scalar_lea.vmem %s1698, 24
            %s1747 = scalar_lea.vmem %s1746, 1
            %v1748 = vld [vmem:[%s1747] sm:$0x7f]
            %v1749 = vlaneseq
            %v1750 = vshrl.u32 %v1749, 7
            %vm1751 = vcmp.eq.s32.totalorder %v1750, 7
            %v1752 = vsel %vm1751, %v1741, %v1748
            %v1753 = vld [vmem:[%s1746] ss:$0 sm:$0xff]
            %1754 = vst [vmem:[%s1746] sm:$0xff] %v1752
            %s1755 = scalar_lea.vmem %s1698, 16
            %s1756 = scalar_lea.vmem %s1755, 1
            %v1757 = vld [vmem:[%s1756] sm:$0x7f]
            %v1758 = vlaneseq
            %v1759 = vshrl.u32 %v1758, 7
            %vm1760 = vcmp.eq.s32.totalorder %v1759, 7
            %v1761 = vsel %vm1760, %v1753, %v1757
            %v1762 = vld [vmem:[%s1755] ss:$0 sm:$0xff]
            %1763 = vst [vmem:[%s1755] sm:$0xff] %v1761
            %s1764 = scalar_lea.vmem %s1698, 8
            %s1765 = scalar_lea.vmem %s1764, 1
            %v1766 = vld [vmem:[%s1765] sm:$0x7f]
            %v1767 = vlaneseq
            %v1768 = vshrl.u32 %v1767, 7
            %vm1769 = vcmp.eq.s32.totalorder %v1768, 7
            %v1770 = vsel %vm1769, %v1762, %v1766
            %v1771 = vld [vmem:[%s1764] ss:$0 sm:$0xff]
            %1772 = vst [vmem:[%s1764] sm:$0xff] %v1770
            %s1773 = scalar_lea.vmem %s1698, 1
            %v1774 = vld [vmem:[%s1773] sm:$0x7f]
            %v1775 = vlaneseq
            %v1776 = vshrl.u32 %v1775, 7
            %vm1777 = vcmp.eq.s32.totalorder %v1776, 7
            %v1778 = vsel %vm1777, %v1771, %v1774
            %v1779 = vld [vmem:[%s1698] ss:$0 sm:$0xff]
            %1780 = vst [vmem:[%s1698] sm:$0xff] %v1778
            %s1781 = smov [#allocation23]
            %v1782 = vld [vmem:[%s1781] sm:$0xff]
            %s1783 = smov [#allocation24]
            %v1784 = vld [vmem:[%s1783] sm:$0xff]
            %s1785 = smov %s257
            %s1786 = smov %s261
            %s1787 = smov %s265
            %s1788 = smov %s269
            %v1789 = vld [vmem:[%s1785] sm:$0xff]
            %v1790 = vld [vmem:[%s1786] sm:$0xff]
            %v1791 = vld [vmem:[%s1787] sm:$0xff]
            %v1792 = vld [vmem:[%s1788] sm:$0xff]
            %v1793 = vmul.f32 %v1782, %v1789
            %v1794 = vmul.f32 %v1784, %v1791
            %v1795 = vsub.f32 %v1793, %v1794
            %v1796 = vmul.f32 %v1782, %v1790
            %v1797 = vmul.f32 %v1784, %v1792
            %v1798 = vsub.f32 %v1796, %v1797
            %v1799 = vmul.f32 %v1784, %v1789
            %v1800 = vmul.f32 %v1782, %v1791
            %v1801 = vadd.f32 %v1799, %v1800
            %v1802 = vmul.f32 %v1784, %v1790
            %v1803 = vmul.f32 %v1782, %v1792
            %v1804 = vadd.f32 %v1802, %v1803
            %1805 = vst [vmem:[%s1785] sm:$0xff] %v1795
            %1806 = vst [vmem:[%s1786] sm:$0xff] %v1798
            %1807 = vst [vmem:[%s1787] sm:$0xff] %v1801
            %1808 = vst [vmem:[%s1788] sm:$0xff] %v1804
            %s1809 = smov [#allocation23]
            %s1810 = scalar_lea.vmem %s1809, 8
            %v1811 = vld [vmem:[%s1810] sm:$0xff]
            %s1812 = smov [#allocation24]
            %s1813 = scalar_lea.vmem %s1812, 8
            %v1814 = vld [vmem:[%s1813] sm:$0xff]
            %s1815 = smov %s257
            %s1816 = scalar_lea.vmem %s1815, 8
            %s1817 = smov %s261
            %s1818 = scalar_lea.vmem %s1817, 8
            %s1819 = smov %s265
            %s1820 = scalar_lea.vmem %s1819, 8
            %s1821 = smov %s269
            %s1822 = scalar_lea.vmem %s1821, 8
            %v1823 = vld [vmem:[%s1816] sm:$0xff]
            %v1824 = vld [vmem:[%s1818] sm:$0xff]
            %v1825 = vld [vmem:[%s1820] sm:$0xff]
            %v1826 = vld [vmem:[%s1822] sm:$0xff]
            %v1827 = vmul.f32 %v1811, %v1823
            %v1828 = vmul.f32 %v1814, %v1825
            %v1829 = vsub.f32 %v1827, %v1828
            %v1830 = vmul.f32 %v1811, %v1824
            %v1831 = vmul.f32 %v1814, %v1826
            %v1832 = vsub.f32 %v1830, %v1831
            %v1833 = vmul.f32 %v1814, %v1823
            %v1834 = vmul.f32 %v1811, %v1825
            %v1835 = vadd.f32 %v1833, %v1834
            %v1836 = vmul.f32 %v1814, %v1824
            %v1837 = vmul.f32 %v1811, %v1826
            %v1838 = vadd.f32 %v1836, %v1837
            %1839 = vst [vmem:[%s1816] sm:$0xff] %v1829
            %1840 = vst [vmem:[%s1818] sm:$0xff] %v1832
            %1841 = vst [vmem:[%s1820] sm:$0xff] %v1835
            %1842 = vst [vmem:[%s1822] sm:$0xff] %v1838
            %s1843 = smov [#allocation23]
            %s1844 = scalar_lea.vmem %s1843, 16
            %v1845 = vld [vmem:[%s1844] sm:$0xff]
            %s1846 = smov [#allocation24]
            %s1847 = scalar_lea.vmem %s1846, 16
            %v1848 = vld [vmem:[%s1847] sm:$0xff]
            %s1849 = smov %s257
            %s1850 = scalar_lea.vmem %s1849, 16
            %s1851 = smov %s261
            %s1852 = scalar_lea.vmem %s1851, 16
            %s1853 = smov %s265
            %s1854 = scalar_lea.vmem %s1853, 16
            %s1855 = smov %s269
            %s1856 = scalar_lea.vmem %s1855, 16
            %v1857 = vld [vmem:[%s1850] sm:$0xff]
            %v1858 = vld [vmem:[%s1852] sm:$0xff]
            %v1859 = vld [vmem:[%s1854] sm:$0xff]
            %v1860 = vld [vmem:[%s1856] sm:$0xff]
            %v1861 = vmul.f32 %v1845, %v1857
            %v1862 = vmul.f32 %v1848, %v1859
            %v1863 = vsub.f32 %v1861, %v1862
            %v1864 = vmul.f32 %v1845, %v1858
            %v1865 = vmul.f32 %v1848, %v1860
            %v1866 = vsub.f32 %v1864, %v1865
            %v1867 = vmul.f32 %v1848, %v1857
            %v1868 = vmul.f32 %v1845, %v1859
            %v1869 = vadd.f32 %v1867, %v1868
            %v1870 = vmul.f32 %v1848, %v1858
            %v1871 = vmul.f32 %v1845, %v1860
            %v1872 = vadd.f32 %v1870, %v1871
            %1873 = vst [vmem:[%s1850] sm:$0xff] %v1863
            %1874 = vst [vmem:[%s1852] sm:$0xff] %v1866
            %1875 = vst [vmem:[%s1854] sm:$0xff] %v1869
            %1876 = vst [vmem:[%s1856] sm:$0xff] %v1872
            %s1877 = smov [#allocation23]
            %s1878 = scalar_lea.vmem %s1877, 24
            %v1879 = vld [vmem:[%s1878] sm:$0xff]
            %s1880 = smov [#allocation24]
            %s1881 = scalar_lea.vmem %s1880, 24
            %v1882 = vld [vmem:[%s1881] sm:$0xff]
            %s1883 = smov %s257
            %s1884 = scalar_lea.vmem %s1883, 24
            %s1885 = smov %s261
            %s1886 = scalar_lea.vmem %s1885, 24
            %s1887 = smov %s265
            %s1888 = scalar_lea.vmem %s1887, 24
            %s1889 = smov %s269
            %s1890 = scalar_lea.vmem %s1889, 24
            %v1891 = vld [vmem:[%s1884] sm:$0xff]
            %v1892 = vld [vmem:[%s1886] sm:$0xff]
            %v1893 = vld [vmem:[%s1888] sm:$0xff]
            %v1894 = vld [vmem:[%s1890] sm:$0xff]
            %v1895 = vmul.f32 %v1879, %v1891
            %v1896 = vmul.f32 %v1882, %v1893
            %v1897 = vsub.f32 %v1895, %v1896
            %v1898 = vmul.f32 %v1879, %v1892
            %v1899 = vmul.f32 %v1882, %v1894
            %v1900 = vsub.f32 %v1898, %v1899
            %v1901 = vmul.f32 %v1882, %v1891
            %v1902 = vmul.f32 %v1879, %v1893
            %v1903 = vadd.f32 %v1901, %v1902
            %v1904 = vmul.f32 %v1882, %v1892
            %v1905 = vmul.f32 %v1879, %v1894
            %v1906 = vadd.f32 %v1904, %v1905
            %1907 = vst [vmem:[%s1884] sm:$0xff] %v1897
            %1908 = vst [vmem:[%s1886] sm:$0xff] %v1900
            %1909 = vst [vmem:[%s1888] sm:$0xff] %v1903
            %1910 = vst [vmem:[%s1890] sm:$0xff] %v1906
            %s1911 = smov %s257
            %s1912 = smov %s265
            %v1913 = vld [vmem:[%s1911] ss:$0 sm:$0xff]
            %s1915 = scalar_lea.vmem %s1911, 4294967295
            %v1916 = vld [vmem:[%s1915] sm:$0xfe]
            %v1917 = vlaneseq
            %v1918 = vshrl.u32 %v1917, 7
            %vm1919 = vcmp.eq.s32.totalorder %v1918, 0
            %v1920 = vsel %vm1919, %v1913, %v1916
            %s1921 = scalar_lea.vmem %s1911, 7
            %v1922 = vld [vmem:[%s1921] ss:$0 sm:$0xff]
            %1923 = vst [vmem:[%s1911] sm:$0xff] %v1920
            %s1924 = scalar_lea.vmem %s1911, 8
            %s1926 = scalar_lea.vmem %s1924, 4294967295
            %v1927 = vld [vmem:[%s1926] sm:$0xfe]
            %v1928 = vlaneseq
            %v1929 = vshrl.u32 %v1928, 7
            %vm1930 = vcmp.eq.s32.totalorder %v1929, 0
            %v1931 = vsel %vm1930, %v1922, %v1927
            %s1932 = scalar_lea.vmem %s1924, 7
            %v1933 = vld [vmem:[%s1932] ss:$0 sm:$0xff]
            %1934 = vst [vmem:[%s1924] sm:$0xff] %v1931
            %s1935 = scalar_lea.vmem %s1911, 16
            %s1937 = scalar_lea.vmem %s1935, 4294967295
            %v1938 = vld [vmem:[%s1937] sm:$0xfe]
            %v1939 = vlaneseq
            %v1940 = vshrl.u32 %v1939, 7
            %vm1941 = vcmp.eq.s32.totalorder %v1940, 0
            %v1942 = vsel %vm1941, %v1933, %v1938
            %s1943 = scalar_lea.vmem %s1935, 7
            %v1944 = vld [vmem:[%s1943] ss:$0 sm:$0xff]
            %1945 = vst [vmem:[%s1935] sm:$0xff] %v1942
            %s1946 = scalar_lea.vmem %s1911, 24
            %s1948 = scalar_lea.vmem %s1946, 4294967295
            %v1949 = vld [vmem:[%s1948] sm:$0xfe]
            %v1950 = vlaneseq
            %v1951 = vshrl.u32 %v1950, 7
            %vm1952 = vcmp.eq.s32.totalorder %v1951, 0
            %v1953 = vsel %vm1952, %v1944, %v1949
            %s1954 = scalar_lea.vmem %s1946, 7
            %v1955 = vld [vmem:[%s1954] ss:$0 sm:$0xff]
            %1956 = vst [vmem:[%s1946] sm:$0xff] %v1953
            %v1957 = vld [vmem:[%s1912] ss:$0 sm:$0xff]
            %s1958 = scalar_lea.vmem %s1911, 1
            %1959 = vst [vmem:[%s1958] sm:$0x1] %v1957
            %s1960 = scalar_lea.vmem %s1912, 24
            %s1961 = scalar_lea.vmem %s1960, 1
            %v1962 = vld [vmem:[%s1961] sm:$0x7f]
            %v1963 = vlaneseq
            %v1964 = vshrl.u32 %v1963, 7
            %vm1965 = vcmp.eq.s32.totalorder %v1964, 7
            %v1966 = vsel %vm1965, %v1955, %v1962
            %v1967 = vld [vmem:[%s1960] ss:$0 sm:$0xff]
            %1968 = vst [vmem:[%s1960] sm:$0xff] %v1966
            %s1969 = scalar_lea.vmem %s1912, 16
            %s1970 = scalar_lea.vmem %s1969, 1
            %v1971 = vld [vmem:[%s1970] sm:$0x7f]
            %v1972 = vlaneseq
            %v1973 = vshrl.u32 %v1972, 7
            %vm1974 = vcmp.eq.s32.totalorder %v1973, 7
            %v1975 = vsel %vm1974, %v1967, %v1971
            %v1976 = vld [vmem:[%s1969] ss:$0 sm:$0xff]
            %1977 = vst [vmem:[%s1969] sm:$0xff] %v1975
            %s1978 = scalar_lea.vmem %s1912, 8
            %s1979 = scalar_lea.vmem %s1978, 1
            %v1980 = vld [vmem:[%s1979] sm:$0x7f]
            %v1981 = vlaneseq
            %v1982 = vshrl.u32 %v1981, 7
            %vm1983 = vcmp.eq.s32.totalorder %v1982, 7
            %v1984 = vsel %vm1983, %v1976, %v1980
            %v1985 = vld [vmem:[%s1978] ss:$0 sm:$0xff]
            %1986 = vst [vmem:[%s1978] sm:$0xff] %v1984
            %s1987 = scalar_lea.vmem %s1912, 1
            %v1988 = vld [vmem:[%s1987] sm:$0x7f]
            %v1989 = vlaneseq
            %v1990 = vshrl.u32 %v1989, 7
            %vm1991 = vcmp.eq.s32.totalorder %v1990, 7
            %v1992 = vsel %vm1991, %v1985, %v1988
            %v1993 = vld [vmem:[%s1912] ss:$0 sm:$0xff]
            %1994 = vst [vmem:[%s1912] sm:$0xff] %v1992
            %s1995 = smov %s261
            %s1996 = smov %s269
            %v1997 = vld [vmem:[%s1995] ss:$0 sm:$0xff]
            %s1999 = scalar_lea.vmem %s1995, 4294967295
            %v2000 = vld [vmem:[%s1999] sm:$0xfe]
            %v2001 = vlaneseq
            %v2002 = vshrl.u32 %v2001, 7
            %vm2003 = vcmp.eq.s32.totalorder %v2002, 0
            %v2004 = vsel %vm2003, %v1997, %v2000
            %s2005 = scalar_lea.vmem %s1995, 7
            %v2006 = vld [vmem:[%s2005] ss:$0 sm:$0xff]
            %2007 = vst [vmem:[%s1995] sm:$0xff] %v2004
            %s2008 = scalar_lea.vmem %s1995, 8
            %s2010 = scalar_lea.vmem %s2008, 4294967295
            %v2011 = vld [vmem:[%s2010] sm:$0xfe]
            %v2012 = vlaneseq
            %v2013 = vshrl.u32 %v2012, 7
            %vm2014 = vcmp.eq.s32.totalorder %v2013, 0
            %v2015 = vsel %vm2014, %v2006, %v2011
            %s2016 = scalar_lea.vmem %s2008, 7
            %v2017 = vld [vmem:[%s2016] ss:$0 sm:$0xff]
            %2018 = vst [vmem:[%s2008] sm:$0xff] %v2015
            %s2019 = scalar_lea.vmem %s1995, 16
            %s2021 = scalar_lea.vmem %s2019, 4294967295
            %v2022 = vld [vmem:[%s2021] sm:$0xfe]
            %v2023 = vlaneseq
            %v2024 = vshrl.u32 %v2023, 7
            %vm2025 = vcmp.eq.s32.totalorder %v2024, 0
            %v2026 = vsel %vm2025, %v2017, %v2022
            %s2027 = scalar_lea.vmem %s2019, 7
            %v2028 = vld [vmem:[%s2027] ss:$0 sm:$0xff]
            %2029 = vst [vmem:[%s2019] sm:$0xff] %v2026
            %s2030 = scalar_lea.vmem %s1995, 24
            %s2032 = scalar_lea.vmem %s2030, 4294967295
            %v2033 = vld [vmem:[%s2032] sm:$0xfe]
            %v2034 = vlaneseq
            %v2035 = vshrl.u32 %v2034, 7
            %vm2036 = vcmp.eq.s32.totalorder %v2035, 0
            %v2037 = vsel %vm2036, %v2028, %v2033
            %s2038 = scalar_lea.vmem %s2030, 7
            %v2039 = vld [vmem:[%s2038] ss:$0 sm:$0xff]
            %2040 = vst [vmem:[%s2030] sm:$0xff] %v2037
            %v2041 = vld [vmem:[%s1996] ss:$0 sm:$0xff]
            %s2042 = scalar_lea.vmem %s1995, 1
            %2043 = vst [vmem:[%s2042] sm:$0x1] %v2041
            %s2044 = scalar_lea.vmem %s1996, 24
            %s2045 = scalar_lea.vmem %s2044, 1
            %v2046 = vld [vmem:[%s2045] sm:$0x7f]
            %v2047 = vlaneseq
            %v2048 = vshrl.u32 %v2047, 7
            %vm2049 = vcmp.eq.s32.totalorder %v2048, 7
            %v2050 = vsel %vm2049, %v2039, %v2046
            %v2051 = vld [vmem:[%s2044] ss:$0 sm:$0xff]
            %2052 = vst [vmem:[%s2044] sm:$0xff] %v2050
            %s2053 = scalar_lea.vmem %s1996, 16
            %s2054 = scalar_lea.vmem %s2053, 1
            %v2055 = vld [vmem:[%s2054] sm:$0x7f]
            %v2056 = vlaneseq
            %v2057 = vshrl.u32 %v2056, 7
            %vm2058 = vcmp.eq.s32.totalorder %v2057, 7
            %v2059 = vsel %vm2058, %v2051, %v2055
            %v2060 = vld [vmem:[%s2053] ss:$0 sm:$0xff]
            %2061 = vst [vmem:[%s2053] sm:$0xff] %v2059
            %s2062 = scalar_lea.vmem %s1996, 8
            %s2063 = scalar_lea.vmem %s2062, 1
            %v2064 = vld [vmem:[%s2063] sm:$0x7f]
            %v2065 = vlaneseq
            %v2066 = vshrl.u32 %v2065, 7
            %vm2067 = vcmp.eq.s32.totalorder %v2066, 7
            %v2068 = vsel %vm2067, %v2060, %v2064
            %v2069 = vld [vmem:[%s2062] ss:$0 sm:$0xff]
            %2070 = vst [vmem:[%s2062] sm:$0xff] %v2068
            %s2071 = scalar_lea.vmem %s1996, 1
            %v2072 = vld [vmem:[%s2071] sm:$0x7f]
            %v2073 = vlaneseq
            %v2074 = vshrl.u32 %v2073, 7
            %vm2075 = vcmp.eq.s32.totalorder %v2074, 7
            %v2076 = vsel %vm2075, %v2069, %v2072
            %v2077 = vld [vmem:[%s1996] ss:$0 sm:$0xff]
            %2078 = vst [vmem:[%s1996] sm:$0xff] %v2076
          $region108: #{custom-call.2} parent=100 // loop_footer
            %s627 = sadd.s32 1, %s623
          $region109: #{custom-call.2} parent=100 // loop_footer_branch
            %622 = sbr.rel target = $region105
          $region110: #{custom-call.2} parent=100 // loop_exit
            _
          %s2079 = sadd.s32 %s429, 1
        $region101: #{custom-call.2} parent=95 // loop_footer
          _
        $region102: #{custom-call.2} parent=95 // loop_footer_branch
          %428 = sbr.rel target = $region98
        $region103: #{custom-call.2} parent=95 // loop_exit
          _
        %s2082 = sand.u32 %s17, 7
        %s2083 = scalar_lea.vmem [#allocation4], %s2082
        %s2084 = sand.u32 %s17, 7
        %s2085 = scalar_lea.vmem [#allocation6], %s2084
        %s2086 = smov [#allocation12]
        %s2087 = smov %s2083
        %v2088 = vlaneseq
        %v2089 = vand.u32 %v2088, 127
        %v2090 = vmov %v2089
        %v2091 = vlaneseq
        %v2092 = vshrl.u32 %v2091, 7
        %v2093 = vmov %v2092
        %v2094 = vld [vmem:[%s2086] sm:$0xff]
        %vm2097 = vcmp.eq.s32.totalorder %v2093, %v2090
        %v2098 = vsel %vm2097, %v2094, 0.0
        %s2099 = scalar_lea.vmem %s2086, 8
        %v2100 = vld [vmem:[%s2099] sm:$0xff]
        %v2102 = vadd.s32 %v2093, 8
        %vm2103 = vcmp.eq.s32.totalorder %v2102, %v2090
        %v2104 = vsel %vm2103, %v2100, %v2098
        %s2105 = scalar_lea.vmem %s2086, 16
        %v2106 = vld [vmem:[%s2105] sm:$0xff]
        %v2108 = vadd.s32 %v2093, 16
        %vm2109 = vcmp.eq.s32.totalorder %v2108, %v2090
        %v2110 = vsel %vm2109, %v2106, %v2104
        %s2111 = scalar_lea.vmem %s2086, 24
        %v2112 = vld [vmem:[%s2111] sm:$0xff]
        %v2114 = vadd.s32 %v2093, 24
        %vm2115 = vcmp.eq.s32.totalorder %v2114, %v2090
        %v2116 = vsel %vm2115, %v2112, %v2110
        %v2117 = vrot.slane %v2116, 4
        %v2118 = vadd.f32 %v2116, %v2117
        %v2119 = vrot.slane %v2118, 2
        %v2120 = vadd.f32 %v2118, %v2119
        %v2121 = vrot.slane %v2120, 1
        %v2122 = vadd.f32 %v2120, %v2121
        %2123 = vst [vmem:[%s2087] sm:$0x1] %v2122
        %s2124 = smov [#allocation15]
        %s2125 = smov %s2085
        %v2126 = vlaneseq
        %v2127 = vand.u32 %v2126, 127
        %v2128 = vmov %v2127
        %v2129 = vlaneseq
        %v2130 = vshrl.u32 %v2129, 7
        %v2131 = vmov %v2130
        %v2132 = vld [vmem:[%s2124] sm:$0xff]
        %vm2135 = vcmp.eq.s32.totalorder %v2131, %v2128
        %v2136 = vsel %vm2135, %v2132, 0.0
        %s2137 = scalar_lea.vmem %s2124, 8
        %v2138 = vld [vmem:[%s2137] sm:$0xff]
        %v2140 = vadd.s32 %v2131, 8
        %vm2141 = vcmp.eq.s32.totalorder %v2140, %v2128
        %v2142 = vsel %vm2141, %v2138, %v2136
        %s2143 = scalar_lea.vmem %s2124, 16
        %v2144 = vld [vmem:[%s2143] sm:$0xff]
        %v2146 = vadd.s32 %v2131, 16
        %vm2147 = vcmp.eq.s32.totalorder %v2146, %v2128
        %v2148 = vsel %vm2147, %v2144, %v2142
        %s2149 = scalar_lea.vmem %s2124, 24
        %v2150 = vld [vmem:[%s2149] sm:$0xff]
        %v2152 = vadd.s32 %v2131, 24
        %vm2153 = vcmp.eq.s32.totalorder %v2152, %v2128
        %v2154 = vsel %vm2153, %v2150, %v2148
        %v2155 = vrot.slane %v2154, 4
        %v2156 = vadd.f32 %v2154, %v2155
        %v2157 = vrot.slane %v2156, 2
        %v2158 = vadd.f32 %v2156, %v2157
        %v2159 = vrot.slane %v2158, 1
        %v2160 = vadd.f32 %v2158, %v2159
        %2161 = vst [vmem:[%s2125] sm:$0x1] %v2160
        %s2163 = ssub.s32 4, 1
        %v2164 = vld [vmem:[#allocation4] sm:%s2163]
        %s2166 = ssub.s32 4, 1
        %2167 = vst [vmem:[%s247] sm:%s2166] %v2164
        %s2169 = ssub.s32 4, 1
        %v2170 = vld [vmem:[#allocation6] sm:%s2169]
        %s2172 = ssub.s32 4, 1
        %2173 = vst [vmem:[%s253] sm:%s2172] %v2170
        %s2174 = sand.u32 %s27, 1
        %s2175 = sand.u32 %s27, 1
        %s2176 = smul.addr %s2175, 2
        %s2177 = scalar_lea.vmem [#allocation5], %s2176
        %s2178 = sand.u32 %s55, 1
        %s2179 = sand.u32 %s55, 1
        %s2180 = smul.addr %s2179, 2
        %s2181 = scalar_lea.vmem [#allocation7], %s2180
        %s2182 = sand.u32 %s17, 1
        %s2183 = sand.u32 %s17, 1
        %s2184 = smul.addr %s2183, 32
        %s2185 = scalar_lea.vmem [#allocation8], %s2184
        %s2186 = sand.u32 %s17, 1
        %s2187 = sand.u32 %s17, 1
        %s2188 = smul.addr %s2187, 32
        %s2189 = scalar_lea.vmem [#allocation9], %s2188
        %s2190 = sand.u32 %s17, 1
        %s2191 = sand.u32 %s17, 1
        %s2192 = smul.addr %s2191, 32
        %s2193 = scalar_lea.vmem [#allocation10], %s2192
        %s2194 = sand.u32 %s17, 1
        %s2195 = sand.u32 %s17, 1
        %s2196 = smul.addr %s2195, 32
        %s2197 = scalar_lea.vmem [#allocation11], %s2196
        // Predicated region
        $region111: #{custom-call.2} parent=95 // pred_check
          %p2198 = pneg %p37
        $region112: #{custom-call.2} parent=95 // pred_check_branch
          %2200 = sbr.rel (%p2198) target = $region114
        $region113: #{custom-call.2} parent=95 // pred_region
          %s2201 = sshrl.u32 %s17, 3
          %s2202 = smul.addr %s2201, 2
          %s2203 = scalar_lea.vmem %s4, %s2202
          // Predicated region
          $region115: #{custom-call.2} parent=113 // pred_check
            _
          $region116: #{custom-call.2} parent=113 // pred_check_branch
            %2205 = sbr.rel (0) target = $region118
          $region117: #{custom-call.2} parent=113 // pred_region
            // Predicated region
            $region119: #{custom-call.2} parent=117 // pred_check
              _
            $region120: #{custom-call.2} parent=117 // pred_check_branch
              %2207 = sbr.rel target = $region122
            $region121: #{custom-call.2} parent=117 // pred_region
              // Predicated region
              $region134: #{custom-call.2} parent=121 // pred_check
                _
              $region135: #{custom-call.2} parent=121 // pred_check_branch
                %2223 = sbr.rel (0) target = $region137
              $region136: #{custom-call.2} parent=121 // pred_region
                %s2225 = ssub.s32 4, 1
                loop: start=0, step=1, limit=1
                $region138: #{custom-call.2} parent=136 // loop_pre_header
                  _
                $region139: #{custom-call.2} parent=136 // loop_header
                  %s2227 = sphi 0, %s2231
                  %p2228 = scmp.ge.s32.totalorder %s2227, 1
                  %s2232 = sphi %s2177, %s2177
                  %s2233 = sphi %s2203, %s2203
                $region140: #{custom-call.2} parent=136 // loop_header_branch
                  %2230 = sbr.rel (%p2228) target = $region144
                $region141: #{custom-call.2} parent=136 // loop_body
                  %v2234 = vld [vmem:[%s2232] sm:%s2225]
                  %2235 = vst [vmem:[%s2233] sm:%s2225] %v2234
                $region142: #{custom-call.2} parent=136 // loop_footer
                  %s2231 = sadd.s32 1, %s2227
                $region143: #{custom-call.2} parent=136 // loop_footer_branch
                  %2226 = sbr.rel target = $region139
                $region144: #{custom-call.2} parent=136 // loop_exit
                  _
              $region137: #{custom-call.2} parent=121 // pred_fallthru
                _
            $region122: #{custom-call.2} parent=117 // pred_fallthru
              _
            // Predicated region
            $region123: #{custom-call.2} parent=117 // pred_check
              _
            $region124: #{custom-call.2} parent=117 // pred_check_branch
              %2209 = sbr.rel (0) target = $region126
            $region125: #{custom-call.2} parent=117 // pred_region
              %s2211 = ssub.s32 4, 1
              loop: start=0, step=1, limit=1
              $region127: #{custom-call.2} parent=125 // loop_pre_header
                _
              $region128: #{custom-call.2} parent=125 // loop_header
                %s2213 = sphi 0, %s2217
                %p2214 = scmp.ge.s32.totalorder %s2213, 1
                %s2218 = sphi %s2177, %s2177
                %s2219 = sphi %s2203, %s2203
              $region129: #{custom-call.2} parent=125 // loop_header_branch
                %2216 = sbr.rel (%p2214) target = $region133
              $region130: #{custom-call.2} parent=125 // loop_body
                %v2220 = vld [vmem:[%s2218] sm:%s2211]
                %2221 = vst [vmem:[%s2219] sm:%s2211] %v2220
              $region131: #{custom-call.2} parent=125 // loop_footer
                %s2217 = sadd.s32 1, %s2213
              $region132: #{custom-call.2} parent=125 // loop_footer_branch
                %2212 = sbr.rel target = $region128
              $region133: #{custom-call.2} parent=125 // loop_exit
                _
            $region126: #{custom-call.2} parent=117 // pred_fallthru
              _
          $region118: #{custom-call.2} parent=113 // pred_fallthru
            _
          %2236 = vnop
        $region114: #{custom-call.2} parent=95 // pred_fallthru
          _
        // Predicated region
        $region145: #{custom-call.2} parent=95 // pred_check
          %p2237 = pneg %p65
        $region146: #{custom-call.2} parent=95 // pred_check_branch
          %2239 = sbr.rel (%p2237) target = $region148
        $region147: #{custom-call.2} parent=95 // pred_region
          %s2240 = sshrl.u32 %s17, 3
          %s2241 = smul.addr %s2240, 2
          %s2242 = scalar_lea.vmem %s5, %s2241
          // Predicated region
          $region149: #{custom-call.2} parent=147 // pred_check
            _
          $region150: #{custom-call.2} parent=147 // pred_check_branch
            %2244 = sbr.rel (0) target = $region152
          $region151: #{custom-call.2} parent=147 // pred_region
            // Predicated region
            $region153: #{custom-call.2} parent=151 // pred_check
              _
            $region154: #{custom-call.2} parent=151 // pred_check_branch
              %2246 = sbr.rel target = $region156
            $region155: #{custom-call.2} parent=151 // pred_region
              // Predicated region
              $region168: #{custom-call.2} parent=155 // pred_check
                _
              $region169: #{custom-call.2} parent=155 // pred_check_branch
                %2262 = sbr.rel (0) target = $region171
              $region170: #{custom-call.2} parent=155 // pred_region
                %s2264 = ssub.s32 4, 1
                loop: start=0, step=1, limit=1
                $region172: #{custom-call.2} parent=170 // loop_pre_header
                  _
                $region173: #{custom-call.2} parent=170 // loop_header
                  %s2266 = sphi 0, %s2270
                  %p2267 = scmp.ge.s32.totalorder %s2266, 1
                  %s2271 = sphi %s2181, %s2181
                  %s2272 = sphi %s2242, %s2242
                $region174: #{custom-call.2} parent=170 // loop_header_branch
                  %2269 = sbr.rel (%p2267) target = $region178
                $region175: #{custom-call.2} parent=170 // loop_body
                  %v2273 = vld [vmem:[%s2271] sm:%s2264]
                  %2274 = vst [vmem:[%s2272] sm:%s2264] %v2273
                $region176: #{custom-call.2} parent=170 // loop_footer
                  %s2270 = sadd.s32 1, %s2266
                $region177: #{custom-call.2} parent=170 // loop_footer_branch
                  %2265 = sbr.rel target = $region173
                $region178: #{custom-call.2} parent=170 // loop_exit
                  _
              $region171: #{custom-call.2} parent=155 // pred_fallthru
                _
            $region156: #{custom-call.2} parent=151 // pred_fallthru
              _
            // Predicated region
            $region157: #{custom-call.2} parent=151 // pred_check
              _
            $region158: #{custom-call.2} parent=151 // pred_check_branch
              %2248 = sbr.rel (0) target = $region160
            $region159: #{custom-call.2} parent=151 // pred_region
              %s2250 = ssub.s32 4, 1
              loop: start=0, step=1, limit=1
              $region161: #{custom-call.2} parent=159 // loop_pre_header
                _
              $region162: #{custom-call.2} parent=159 // loop_header
                %s2252 = sphi 0, %s2256
                %p2253 = scmp.ge.s32.totalorder %s2252, 1
                %s2257 = sphi %s2181, %s2181
                %s2258 = sphi %s2242, %s2242
              $region163: #{custom-call.2} parent=159 // loop_header_branch
                %2255 = sbr.rel (%p2253) target = $region167
              $region164: #{custom-call.2} parent=159 // loop_body
                %v2259 = vld [vmem:[%s2257] sm:%s2250]
                %2260 = vst [vmem:[%s2258] sm:%s2250] %v2259
              $region165: #{custom-call.2} parent=159 // loop_footer
                %s2256 = sadd.s32 1, %s2252
              $region166: #{custom-call.2} parent=159 // loop_footer_branch
                %2251 = sbr.rel target = $region162
              $region167: #{custom-call.2} parent=159 // loop_exit
                _
            $region160: #{custom-call.2} parent=151 // pred_fallthru
              _
          $region152: #{custom-call.2} parent=147 // pred_fallthru
            _
          %2275 = vnop
        $region148: #{custom-call.2} parent=95 // pred_fallthru
          _
        %s2276 = smul.addr %s17, 32
        %s2277 = scalar_lea.vmem %s6, %s2276
        // Predicated region
        $region179: #{custom-call.2} parent=95 // pred_check
          _
        $region180: #{custom-call.2} parent=95 // pred_check_branch
          %2279 = sbr.rel (0) target = $region182
        $region181: #{custom-call.2} parent=95 // pred_region
          // Predicated region
          $region183: #{custom-call.2} parent=181 // pred_check
            _
          $region184: #{custom-call.2} parent=181 // pred_check_branch
            %2281 = sbr.rel (0) target = $region186
          $region185: #{custom-call.2} parent=181 // pred_region
            loop: start=0, step=1, limit=1
            $region187: #{custom-call.2} parent=185 // loop_pre_header
              _
            $region188: #{custom-call.2} parent=185 // loop_header
              %s2283 = sphi 0, %s2287
              %p2284 = scmp.ge.s32.totalorder %s2283, 1
              %s2288 = sphi %s2185, %s2185
              %s2289 = sphi %s2277, %s2277
            $region189: #{custom-call.2} parent=185 // loop_header_branch
              %2286 = sbr.rel (%p2284) target = $region193
            $region190: #{custom-call.2} parent=185 // loop_body
              %v2290 = vld [vmem:[%s2288] sm:$0xff]
              %2291 = vst [vmem:[%s2289] sm:$0xff] %v2290
              %v2292 = vld [vmem:[%s2288 + $0x8] sm:$0xff]
              %2293 = vst [vmem:[%s2289 + $0x8] sm:$0xff] %v2292
              %v2294 = vld [vmem:[%s2288 + $0x10] sm:$0xff]
              %2295 = vst [vmem:[%s2289 + $0x10] sm:$0xff] %v2294
              %v2296 = vld [vmem:[%s2288 + $0x18] sm:$0xff]
              %2297 = vst [vmem:[%s2289 + $0x18] sm:$0xff] %v2296
            $region191: #{custom-call.2} parent=185 // loop_footer
              %s2287 = sadd.s32 1, %s2283
            $region192: #{custom-call.2} parent=185 // loop_footer_branch
              %2282 = sbr.rel target = $region188
            $region193: #{custom-call.2} parent=185 // loop_exit
              _
          $region186: #{custom-call.2} parent=181 // pred_fallthru
            _
          // Predicated region
          $region194: #{custom-call.2} parent=181 // pred_check
            _
          $region195: #{custom-call.2} parent=181 // pred_check_branch
            %2299 = sbr.rel target = $region197
          $region196: #{custom-call.2} parent=181 // pred_region
            _
          $region197: #{custom-call.2} parent=181 // pred_fallthru
            _
        $region182: #{custom-call.2} parent=95 // pred_fallthru
          _
        %2300 = vnop
        %s2301 = smul.addr %s17, 32
        %s2302 = scalar_lea.vmem %s7, %s2301
        // Predicated region
        $region198: #{custom-call.2} parent=95 // pred_check
          _
        $region199: #{custom-call.2} parent=95 // pred_check_branch
          %2304 = sbr.rel (0) target = $region201
        $region200: #{custom-call.2} parent=95 // pred_region
          // Predicated region
          $region202: #{custom-call.2} parent=200 // pred_check
            _
          $region203: #{custom-call.2} parent=200 // pred_check_branch
            %2306 = sbr.rel (0) target = $region205
          $region204: #{custom-call.2} parent=200 // pred_region
            loop: start=0, step=1, limit=1
            $region206: #{custom-call.2} parent=204 // loop_pre_header
              _
            $region207: #{custom-call.2} parent=204 // loop_header
              %s2308 = sphi 0, %s2312
              %p2309 = scmp.ge.s32.totalorder %s2308, 1
              %s2313 = sphi %s2189, %s2189
              %s2314 = sphi %s2302, %s2302
            $region208: #{custom-call.2} parent=204 // loop_header_branch
              %2311 = sbr.rel (%p2309) target = $region212
            $region209: #{custom-call.2} parent=204 // loop_body
              %v2315 = vld [vmem:[%s2313] sm:$0xff]
              %2316 = vst [vmem:[%s2314] sm:$0xff] %v2315
              %v2317 = vld [vmem:[%s2313 + $0x8] sm:$0xff]
              %2318 = vst [vmem:[%s2314 + $0x8] sm:$0xff] %v2317
              %v2319 = vld [vmem:[%s2313 + $0x10] sm:$0xff]
              %2320 = vst [vmem:[%s2314 + $0x10] sm:$0xff] %v2319
              %v2321 = vld [vmem:[%s2313 + $0x18] sm:$0xff]
              %2322 = vst [vmem:[%s2314 + $0x18] sm:$0xff] %v2321
            $region210: #{custom-call.2} parent=204 // loop_footer
              %s2312 = sadd.s32 1, %s2308
            $region211: #{custom-call.2} parent=204 // loop_footer_branch
              %2307 = sbr.rel target = $region207
            $region212: #{custom-call.2} parent=204 // loop_exit
              _
          $region205: #{custom-call.2} parent=200 // pred_fallthru
            _
          // Predicated region
          $region213: #{custom-call.2} parent=200 // pred_check
            _
          $region214: #{custom-call.2} parent=200 // pred_check_branch
            %2324 = sbr.rel target = $region216
          $region215: #{custom-call.2} parent=200 // pred_region
            _
          $region216: #{custom-call.2} parent=200 // pred_fallthru
            _
        $region201: #{custom-call.2} parent=95 // pred_fallthru
          _
        %2325 = vnop
        %s2326 = smul.addr %s17, 32
        %s2327 = scalar_lea.vmem %s8, %s2326
        // Predicated region
        $region217: #{custom-call.2} parent=95 // pred_check
          _
        $region218: #{custom-call.2} parent=95 // pred_check_branch
          %2329 = sbr.rel (0) target = $region220
        $region219: #{custom-call.2} parent=95 // pred_region
          // Predicated region
          $region221: #{custom-call.2} parent=219 // pred_check
            _
          $region222: #{custom-call.2} parent=219 // pred_check_branch
            %2331 = sbr.rel (0) target = $region224
          $region223: #{custom-call.2} parent=219 // pred_region
            loop: start=0, step=1, limit=1
            $region225: #{custom-call.2} parent=223 // loop_pre_header
              _
            $region226: #{custom-call.2} parent=223 // loop_header
              %s2333 = sphi 0, %s2337
              %p2334 = scmp.ge.s32.totalorder %s2333, 1
              %s2338 = sphi %s2193, %s2193
              %s2339 = sphi %s2327, %s2327
            $region227: #{custom-call.2} parent=223 // loop_header_branch
              %2336 = sbr.rel (%p2334) target = $region231
            $region228: #{custom-call.2} parent=223 // loop_body
              %v2340 = vld [vmem:[%s2338] sm:$0xff]
              %2341 = vst [vmem:[%s2339] sm:$0xff] %v2340
              %v2342 = vld [vmem:[%s2338 + $0x8] sm:$0xff]
              %2343 = vst [vmem:[%s2339 + $0x8] sm:$0xff] %v2342
              %v2344 = vld [vmem:[%s2338 + $0x10] sm:$0xff]
              %2345 = vst [vmem:[%s2339 + $0x10] sm:$0xff] %v2344
              %v2346 = vld [vmem:[%s2338 + $0x18] sm:$0xff]
              %2347 = vst [vmem:[%s2339 + $0x18] sm:$0xff] %v2346
            $region229: #{custom-call.2} parent=223 // loop_footer
              %s2337 = sadd.s32 1, %s2333
            $region230: #{custom-call.2} parent=223 // loop_footer_branch
              %2332 = sbr.rel target = $region226
            $region231: #{custom-call.2} parent=223 // loop_exit
              _
          $region224: #{custom-call.2} parent=219 // pred_fallthru
            _
          // Predicated region
          $region232: #{custom-call.2} parent=219 // pred_check
            _
          $region233: #{custom-call.2} parent=219 // pred_check_branch
            %2349 = sbr.rel target = $region235
          $region234: #{custom-call.2} parent=219 // pred_region
            _
          $region235: #{custom-call.2} parent=219 // pred_fallthru
            _
        $region220: #{custom-call.2} parent=95 // pred_fallthru
          _
        %2350 = vnop
        %s2351 = smul.addr %s17, 32
        %s2352 = scalar_lea.vmem %s9, %s2351
        // Predicated region
        $region236: #{custom-call.2} parent=95 // pred_check
          _
        $region237: #{custom-call.2} parent=95 // pred_check_branch
          %2354 = sbr.rel (0) target = $region239
        $region238: #{custom-call.2} parent=95 // pred_region
          // Predicated region
          $region240: #{custom-call.2} parent=238 // pred_check
            _
          $region241: #{custom-call.2} parent=238 // pred_check_branch
            %2356 = sbr.rel (0) target = $region243
          $region242: #{custom-call.2} parent=238 // pred_region
            loop: start=0, step=1, limit=1
            $region244: #{custom-call.2} parent=242 // loop_pre_header
              _
            $region245: #{custom-call.2} parent=242 // loop_header
              %s2358 = sphi 0, %s2362
              %p2359 = scmp.ge.s32.totalorder %s2358, 1
              %s2363 = sphi %s2197, %s2197
              %s2364 = sphi %s2352, %s2352
            $region246: #{custom-call.2} parent=242 // loop_header_branch
              %2361 = sbr.rel (%p2359) target = $region250
            $region247: #{custom-call.2} parent=242 // loop_body
              %v2365 = vld [vmem:[%s2363] sm:$0xff]
              %2366 = vst [vmem:[%s2364] sm:$0xff] %v2365
              %v2367 = vld [vmem:[%s2363 + $0x8] sm:$0xff]
              %2368 = vst [vmem:[%s2364 + $0x8] sm:$0xff] %v2367
              %v2369 = vld [vmem:[%s2363 + $0x10] sm:$0xff]
              %2370 = vst [vmem:[%s2364 + $0x10] sm:$0xff] %v2369
              %v2371 = vld [vmem:[%s2363 + $0x18] sm:$0xff]
              %2372 = vst [vmem:[%s2364 + $0x18] sm:$0xff] %v2371
            $region248: #{custom-call.2} parent=242 // loop_footer
              %s2362 = sadd.s32 1, %s2358
            $region249: #{custom-call.2} parent=242 // loop_footer_branch
              %2357 = sbr.rel target = $region245
            $region250: #{custom-call.2} parent=242 // loop_exit
              _
          $region243: #{custom-call.2} parent=238 // pred_fallthru
            _
          // Predicated region
          $region251: #{custom-call.2} parent=238 // pred_check
            _
          $region252: #{custom-call.2} parent=238 // pred_check_branch
            %2374 = sbr.rel target = $region254
          $region253: #{custom-call.2} parent=238 // pred_region
            _
          $region254: #{custom-call.2} parent=238 // pred_fallthru
            _
        $region239: #{custom-call.2} parent=95 // pred_fallthru
          _
        %2375 = vnop
      $region96: #{custom-call.2} parent=5 // pred_fallthru
        _
      %p2376 = scmp.le.s32.totalorder 2, %s12
      // Predicated region
      $region255: #{custom-call.2} parent=5 // pred_check
        %p2377 = pneg %p2376
      $region256: #{custom-call.2} parent=5 // pred_check_branch
        %2379 = sbr.rel (%p2377) target = $region258
      $region257: #{custom-call.2} parent=5 // pred_region
        %s2380 = ssub.s32 %s12, 2
        // Predicated region
        $region259: #{custom-call.2} parent=257 // pred_check
          %p2381 = pneg %p43
        $region260: #{custom-call.2} parent=257 // pred_check_branch
          %2383 = sbr.rel (%p2381) target = $region262
        $region261: #{custom-call.2} parent=257 // pred_region
          %s2384 = sand.u32 %s28, 1
          %s2385 = sand.u32 %s28, 1
          %s2386 = smul.addr %s2385, 2
          %s2387 = scalar_lea.vmem [#allocation5], %s2386
        $region262: #{custom-call.2} parent=257 // pred_fallthru
          _
        // Predicated region
        $region263: #{custom-call.2} parent=257 // pred_check
          %p2388 = pneg %p71
        $region264: #{custom-call.2} parent=257 // pred_check_branch
          %2390 = sbr.rel (%p2388) target = $region266
        $region265: #{custom-call.2} parent=257 // pred_region
          %s2391 = sand.u32 %s56, 1
          %s2392 = sand.u32 %s56, 1
          %s2393 = smul.addr %s2392, 2
          %s2394 = scalar_lea.vmem [#allocation7], %s2393
        $region266: #{custom-call.2} parent=257 // pred_fallthru
          _
        %s2395 = sand.u32 %s18, 1
        %s2396 = sand.u32 %s18, 1
        %s2397 = smul.addr %s2396, 32
        %s2398 = scalar_lea.vmem [#allocation8], %s2397
        %s2399 = sand.u32 %s18, 1
        %s2400 = sand.u32 %s18, 1
        %s2401 = smul.addr %s2400, 32
        %s2402 = scalar_lea.vmem [#allocation9], %s2401
        %s2403 = sand.u32 %s18, 1
        %s2404 = sand.u32 %s18, 1
        %s2405 = smul.addr %s2404, 32
        %s2406 = scalar_lea.vmem [#allocation10], %s2405
        %s2407 = sand.u32 %s18, 1
        %s2408 = sand.u32 %s18, 1
        %s2409 = smul.addr %s2408, 32
        %s2410 = scalar_lea.vmem [#allocation11], %s2409
      $region258: #{custom-call.2} parent=5 // pred_fallthru
        _
    $region6: #{custom-call.2} parent=1 // loop_footer
      %s16 = sadd.s32 1, %s12
    $region7: #{custom-call.2} parent=1 // loop_footer_branch
      %11 = sbr.rel target = $region3
    $region8: #{custom-call.2} parent=1 // loop_exit
      _

// kernel: laplacian_eigenmaps_loss.1
$region0: #{laplacian_eigenmaps_loss.1}
  #allocation0 [shape = 'u32[]', space=smem, size = 0x4, offset = 0x4, fixed_abs, tag = 'smem constant byte address 0x4 - core index']
  #allocation1 [shape = 'u32[72,128]{1,0:T(1,128)}', space=vmem, size = 0x9000, scoped, tag = 'internal scratch']
  %s0 = inlined_call_operand.hbm [shape: f32[64,64], index: 0, kind: input, shape index: {}]
  %s1 = inlined_call_operand.hbm [shape: f32[64,64], index: 1, kind: input, shape index: {}]
  %s2 = inlined_call_operand.vmem [shape: f32[2,64,64], index: 2, kind: output, shape index: {}]
  %s3 = sld [smem:[#allocation0]]
  $region83: #{laplacian_eigenmaps_loss.1} parent=0
    _
  %s5 = ssub.s32 1, %s3
  %s6 = scalar_select 0, %s5, %s3
  $region1: #{laplacian_eigenmaps_loss.1} parent=0
    #allocation2 [shape = 'u8[32768]{0}', space=vmem, size = 0x8000, scoped, tag = 'input window, operand 0']
    #allocation3 [shape = 's32[2]{0}', space=sflag, size = 0x8, scoped, tag = 'scoped memory for laplacian_eigenmaps_loss.1']
    #allocation4 [shape = 'u8[32768]{0}', space=vmem, size = 0x8000, scoped, tag = 'input window, operand 1']
    #allocation5 [shape = 's32[2]{0}', space=sflag, size = 0x8, scoped, tag = 'scoped memory for laplacian_eigenmaps_loss.1']
    #allocation6 [shape = 'u8[65536]{0}', space=vmem, size = 0x10000, scoped, tag = 'output window, operand 0']
    %7 = vsyncpa [#allocation3], 0
    %s8 = scalar_lea.sflag [#allocation3], 1
    %9 = vsyncpa %s8, 0
    %10 = vsyncpa [#allocation5], 0
    %s11 = scalar_lea.sflag [#allocation5], 1
    %12 = vsyncpa %s11, 0
    loop: start=0, step=1, limit=4
    $region2: #{laplacian_eigenmaps_loss.1} parent=1 // loop_pre_header
      _
    $region3: #{laplacian_eigenmaps_loss.1} parent=1 // loop_header
      %s14 = sphi 0, %s18
      %p15 = scmp.ge.s32.totalorder %s14, 4
      %s24 = sphi 0, %s26
      %s27 = sphi 0, %s24
      %s28 = sphi 0, %s27
      %s44 = sphi 0, %s28
      %s50 = sphi 0, %s52
      %s53 = sphi 0, %s50
      %s54 = sphi 0, %s53
      %s70 = sphi 0, %s54
      %s76 = sphi 0, %s78
      %s79 = sphi 0, %s76
      %s80 = sphi 0, %s79
      %s96 = sphi 0, %s80
    $region4: #{laplacian_eigenmaps_loss.1} parent=1 // loop_header_branch
      %17 = sbr.rel (%p15) target = $region8
    $region5: #{laplacian_eigenmaps_loss.1} parent=1 // loop_body
      %s19 = ssub.s32 %s14, 1
      %s20 = ssub.s32 %s14, 2
      %s21 = sadd.s32 %s14, 1
      %s22 = ssub.s32 %s14, %s21
      %p23 = scmp.eq.s32.totalorder %s22, 0
      %s25 = sadd.s32 %s24, 1
      %s26 = scalar_select %p23, %s24, %s25
      %p29 = pneg %p23
      %p30 = scmp.eq.s32.totalorder %s14, 1
      %p31 = por %p29, %p30
      %p32 = scmp.ne.s32.totalorder %s24, %s27
      %p33 = scmp.eq.s32.totalorder %s14, 0
      %p34 = por %p32, %p33
      %p35 = scmp.ne.s32.totalorder %s24, %s27
      %p36 = scmp.eq.s32.totalorder %s19, 1
      %p37 = por %p35, %p36
      %p38 = scmp.ne.s32.totalorder %s27, %s28
      %p39 = scmp.eq.s32.totalorder %s19, 0
      %p40 = por %p38, %p39
      %p41 = scmp.ne.s32.totalorder %s27, %s28
      %p42 = scmp.eq.s32.totalorder %s20, 1
      %p43 = por %p41, %p42
      %p45 = scmp.ne.s32.totalorder %s28, %s44
      %p46 = scmp.eq.s32.totalorder %s20, 0
      %p47 = por %p45, %p46
      %s48 = ssub.s32 %s14, %s21
      %p49 = scmp.eq.s32.totalorder %s48, 0
      %s51 = sadd.s32 %s50, 1
      %s52 = scalar_select %p49, %s50, %s51
      %p55 = pneg %p49
      %p56 = scmp.eq.s32.totalorder %s14, 1
      %p57 = por %p55, %p56
      %p58 = scmp.ne.s32.totalorder %s50, %s53
      %p59 = scmp.eq.s32.totalorder %s14, 0
      %p60 = por %p58, %p59
      %p61 = scmp.ne.s32.totalorder %s50, %s53
      %p62 = scmp.eq.s32.totalorder %s19, 1
      %p63 = por %p61, %p62
      %p64 = scmp.ne.s32.totalorder %s53, %s54
      %p65 = scmp.eq.s32.totalorder %s19, 0
      %p66 = por %p64, %p65
      %p67 = scmp.ne.s32.totalorder %s53, %s54
      %p68 = scmp.eq.s32.totalorder %s20, 1
      %p69 = por %p67, %p68
      %p71 = scmp.ne.s32.totalorder %s54, %s70
      %p72 = scmp.eq.s32.totalorder %s20, 0
      %p73 = por %p71, %p72
      %s74 = ssub.s32 %s14, %s21
      %p75 = scmp.eq.s32.totalorder %s74, 0
      %s77 = sadd.s32 %s76, 1
      %s78 = scalar_select %p75, %s76, %s77
      %p81 = pneg %p75
      %p82 = scmp.eq.s32.totalorder %s14, 1
      %p83 = por %p81, %p82
      %p84 = scmp.ne.s32.totalorder %s76, %s79
      %p85 = scmp.eq.s32.totalorder %s14, 0
      %p86 = por %p84, %p85
      %p87 = scmp.ne.s32.totalorder %s76, %s79
      %p88 = scmp.eq.s32.totalorder %s19, 1
      %p89 = por %p87, %p88
      %p90 = scmp.ne.s32.totalorder %s79, %s80
      %p91 = scmp.eq.s32.totalorder %s19, 0
      %p92 = por %p90, %p91
      %p93 = scmp.ne.s32.totalorder %s79, %s80
      %p94 = scmp.eq.s32.totalorder %s20, 1
      %p95 = por %p93, %p94
      %p97 = scmp.ne.s32.totalorder %s80, %s96
      %p98 = scmp.eq.s32.totalorder %s20, 0
      %p99 = por %p97, %p98
      %p100 = scmp.le.s32.totalorder 1, %s14
      %p101 = scmp.lt.s32.totalorder %s14, 3
      %p102 = pnand %p100, %p101
      %p103 = pneg %p102
      // Predicated region
      $region9: #{laplacian_eigenmaps_loss.1} parent=5 // pred_check
        _
      $region10: #{laplacian_eigenmaps_loss.1} parent=5 // pred_check_branch
        %105 = sbr.rel (%p102) target = $region12
      $region11: #{laplacian_eigenmaps_loss.1} parent=5 // pred_region
        %s106 = ssub.s32 %s14, 1
      $region12: #{laplacian_eigenmaps_loss.1} parent=5 // pred_fallthru
        _
      %p107 = scmp.lt.s32.totalorder %s14, 2
      // Predicated region
      $region13: #{laplacian_eigenmaps_loss.1} parent=5 // pred_check
        %p108 = pneg %p107
      $region14: #{laplacian_eigenmaps_loss.1} parent=5 // pred_check_branch
        %110 = sbr.rel (%p108) target = $region16
      $region15: #{laplacian_eigenmaps_loss.1} parent=5 // pred_region
        // Predicated region
        $region17: #{laplacian_eigenmaps_loss.1} parent=15 // pred_check
          %p111 = pneg %p34
        $region18: #{laplacian_eigenmaps_loss.1} parent=15 // pred_check_branch
          %113 = sbr.rel (%p111) target = $region20
        $region19: #{laplacian_eigenmaps_loss.1} parent=15 // pred_region
          %s114 = sand.u32 %s24, 1
          %s115 = scalar_lea.sflag [#allocation3], %s114
          %s116 = sand.u32 %s24, 1
          %s117 = smul.addr %s116, 32
          %s118 = scalar_lea.vmem [#allocation2], %s117
          %s119 = smul.u32 4, %s14
          %121 = vsyncadd %s115, 0
          %s122 = smul.addr %s119, 8
          %s123 = scalar_lea.hbm %s0, %s122
          %s124 = sshll.u32 %s123, 4
          %s125 = int_to_ptr.hbm [resolvable:$true] %s124
          %s126 = sshll.u32 %s118, 4
          %s127 = int_to_ptr.vmem [resolvable:$true] %s126
          %132 = dma.hbm_to_vmem [thread:$0]  %s125, 512, %s127, %s115, 128, 128, 8
        $region20: #{laplacian_eigenmaps_loss.1} parent=15 // pred_fallthru
          _
        // Predicated region
        $region21: #{laplacian_eigenmaps_loss.1} parent=15 // pred_check
          %p133 = pneg %p60
        $region22: #{laplacian_eigenmaps_loss.1} parent=15 // pred_check_branch
          %135 = sbr.rel (%p133) target = $region24
        $region23: #{laplacian_eigenmaps_loss.1} parent=15 // pred_region
          %s136 = sand.u32 %s50, 1
          %s137 = scalar_lea.sflag [#allocation5], %s136
          %s138 = sand.u32 %s50, 1
          %s139 = smul.addr %s138, 32
          %s140 = scalar_lea.vmem [#allocation4], %s139
          %s141 = smul.u32 4, %s14
          %143 = vsyncadd %s137, 0
          %s144 = smul.addr %s141, 8
          %s145 = scalar_lea.hbm %s1, %s144
          %s146 = sshll.u32 %s145, 4
          %s147 = int_to_ptr.hbm [resolvable:$true] %s146
          %s148 = sshll.u32 %s140, 4
          %s149 = int_to_ptr.vmem [resolvable:$true] %s148
          %154 = dma.hbm_to_vmem [thread:$0]  %s147, 512, %s149, %s137, 128, 128, 8
        $region24: #{laplacian_eigenmaps_loss.1} parent=15 // pred_fallthru
          _
      $region16: #{laplacian_eigenmaps_loss.1} parent=5 // pred_fallthru
        _
      %p155 = scmp.le.s32.totalorder 1, %s14
      %p156 = scmp.lt.s32.totalorder %s14, 3
      %p157 = pnand %p155, %p156
      %p158 = pneg %p157
      // Predicated region
      $region25: #{laplacian_eigenmaps_loss.1} parent=5 // pred_check
        _
      $region26: #{laplacian_eigenmaps_loss.1} parent=5 // pred_check_branch
        %160 = sbr.rel (%p157) target = $region28
      $region27: #{laplacian_eigenmaps_loss.1} parent=5 // pred_region
        %s161 = ssub.s32 %s14, 1
        %s162 = sand.u32 %s27, 1
        %s163 = scalar_lea.sflag [#allocation3], %s162
        %s164 = sand.u32 %s27, 1
        %s165 = smul.addr %s164, 32
        %s166 = scalar_lea.vmem [#allocation2], %s165
        // Predicated region
        $region29: #{laplacian_eigenmaps_loss.1} parent=27 // pred_check
          %p167 = pneg %p40
        $region30: #{laplacian_eigenmaps_loss.1} parent=27 // pred_check_branch
          %169 = sbr.rel (%p167) target = $region32
        $region31: #{laplacian_eigenmaps_loss.1} parent=27 // pred_region
          %171 = dma.done %s163, 512
        $region32: #{laplacian_eigenmaps_loss.1} parent=27 // pred_fallthru
          _
        %s172 = sand.u32 %s53, 1
        %s173 = scalar_lea.sflag [#allocation5], %s172
        %s174 = sand.u32 %s53, 1
        %s175 = smul.addr %s174, 32
        %s176 = scalar_lea.vmem [#allocation4], %s175
        // Predicated region
        $region33: #{laplacian_eigenmaps_loss.1} parent=27 // pred_check
          %p177 = pneg %p66
        $region34: #{laplacian_eigenmaps_loss.1} parent=27 // pred_check_branch
          %179 = sbr.rel (%p177) target = $region36
        $region35: #{laplacian_eigenmaps_loss.1} parent=27 // pred_region
          %181 = dma.done %s173, 512
        $region36: #{laplacian_eigenmaps_loss.1} parent=27 // pred_fallthru
          _
        %s182 = sand.u32 %s27, 1
        %s183 = scalar_lea.sflag [#allocation3], %s182
        %s184 = sand.u32 %s27, 1
        %s185 = smul.addr %s184, 32
        %s186 = scalar_lea.vmem [#allocation2], %s185
        %p187 = pneg %p40
        %p188 = pneg %p37
        %s189 = sand.u32 %s53, 1
        %s190 = scalar_lea.sflag [#allocation5], %s189
        %s191 = sand.u32 %s53, 1
        %s192 = smul.addr %s191, 32
        %s193 = scalar_lea.vmem [#allocation4], %s192
        %p194 = pneg %p66
        %p195 = pneg %p63
        %p196 = pneg %p92
        %p197 = pneg %p89
        %s198 = sand.u32 %s79, 1
        %s199 = sand.u32 %s79, 1
        %s200 = smul.addr %s199, 64
        %s201 = scalar_lea.vmem [#allocation6], %s200
        %s202 = smul.u32 4, %s19
        %s203 = smul.u32 4, %s19
        %s204 = smul.u32 4, %s19
        %v205 = vld [vmem:[%s166] sm:$0xff]
        %v206 = vld [vmem:[%s166 + $0x8] sm:$0xff]
        %v207 = vld [vmem:[%s166 + $0x10] sm:$0xff]
        %v208 = vld [vmem:[%s166 + $0x18] sm:$0xff]
        %v209 = vmul.f32 %v205, 0.5
        %v210 = vmul.f32 %v206, 0.5
        %v211 = vmul.f32 %v207, 0.5
        %v212 = vmul.f32 %v208, 0.5
        %v213 = vtanh.pop %v209
        %v214 = vtanh.pop %v210
        %v215 = vtanh.pop %v211
        %v216 = vtanh.pop %v212
        %v217 = vadd.f32 %v213, 1.0
        %v218 = vadd.f32 %v214, 1.0
        %v219 = vadd.f32 %v215, 1.0
        %v220 = vadd.f32 %v216, 1.0
        %v221 = vmul.f32 %v217, 0.5
        %v222 = vmul.f32 %v218, 0.5
        %v223 = vmul.f32 %v219, 0.5
        %v224 = vmul.f32 %v220, 0.5
        %v225 = vld [vmem:[%s176] sm:$0xff]
        %v226 = vld [vmem:[%s176 + $0x8] sm:$0xff]
        %v227 = vld [vmem:[%s176 + $0x10] sm:$0xff]
        %v228 = vld [vmem:[%s176 + $0x18] sm:$0xff]
        %v229 = vlaneseq
        %v230 = vshrl.u32 %v229, 7
        %v231 = vadd.s32 %v230, 8
        %v232 = vadd.s32 %v230, 16
        %v233 = vadd.s32 %v230, 24
        %s234 = smul.u32 %s19, 32
        %v235 = vstv %s234
        %v236 = vadd.s32 %v230, %v235
        %v237 = vadd.s32 %v231, %v235
        %v238 = vadd.s32 %v232, %v235
        %v239 = vadd.s32 %v233, %v235
        %v240 = vlaneseq
        %v241 = vand.u32 %v240, 127
        %vm242 = vcmp.eq.s32.totalorder %v236, %v241
        %vm243 = vcmp.eq.s32.totalorder %v237, %v241
        %vm244 = vcmp.eq.s32.totalorder %v238, %v241
        %vm245 = vcmp.eq.s32.totalorder %v239, %v241
        %vm246 = vcmask 523264
        %v247 = vsel %vm246, %v221, 0.0
        %248 = vadd.xlane.f32.xlu0 %v247
        %v249 = vpop.xlane.xlu0 %248
        %v250 = vsel %vm246, %v222, 0.0
        %251 = vadd.xlane.f32.xlu0 %v250
        %v252 = vpop.xlane.xlu0 %251
        %v253 = vsel %vm246, %v223, 0.0
        %254 = vadd.xlane.f32.xlu0 %v253
        %v255 = vpop.xlane.xlu0 %254
        %v256 = vsel %vm246, %v224, 0.0
        %257 = vadd.xlane.f32.xlu0 %v256
        %v258 = vpop.xlane.xlu0 %257
        %v259 = vsel %vm246, %v225, 0.0
        %260 = vadd.xlane.f32.xlu0 %v259
        %v261 = vpop.xlane.xlu0 %260
        %v262 = vsel %vm246, %v226, 0.0
        %263 = vadd.xlane.f32.xlu0 %v262
        %v264 = vpop.xlane.xlu0 %263
        %v265 = vsel %vm246, %v227, 0.0
        %266 = vadd.xlane.f32.xlu0 %v265
        %v267 = vpop.xlane.xlu0 %266
        %v268 = vsel %vm246, %v228, 0.0
        %269 = vadd.xlane.f32.xlu0 %v268
        %v270 = vpop.xlane.xlu0 %269
        %v271 = vsub.f32 %v249, %v221
        %v272 = vsub.f32 %v252, %v222
        %v273 = vsub.f32 %v255, %v223
        %v274 = vsub.f32 %v258, %v224
        %v275 = vsub.f32 0.0, %v221
        %v276 = vsub.f32 0.0, %v222
        %v277 = vsub.f32 0.0, %v223
        %v278 = vsub.f32 0.0, %v224
        %v279 = vsel %vm242, %v271, %v275
        %v280 = vsel %vm243, %v272, %v276
        %v281 = vsel %vm244, %v273, %v277
        %v282 = vsel %vm245, %v274, %v278
        %283 = vst.msk [vmem:[%s201] sm:$0xff] %vm246, %v279
        %284 = vst.msk [vmem:[%s201 + $0x8] sm:$0xff] %vm246, %v280
        %285 = vst.msk [vmem:[%s201 + $0x10] sm:$0xff] %vm246, %v281
        %286 = vst.msk [vmem:[%s201 + $0x18] sm:$0xff] %vm246, %v282
        %v287 = vsub.f32 %v261, %v225
        %v288 = vsub.f32 %v264, %v226
        %v289 = vsub.f32 %v267, %v227
        %v290 = vsub.f32 %v270, %v228
        %v291 = vsub.f32 0.0, %v225
        %v292 = vsub.f32 0.0, %v226
        %v293 = vsub.f32 0.0, %v227
        %v294 = vsub.f32 0.0, %v228
        %v295 = vsel %vm242, %v287, %v291
        %v296 = vsel %vm243, %v288, %v292
        %v297 = vsel %vm244, %v289, %v293
        %v298 = vsel %vm245, %v290, %v294
        %s299 = scalar_lea.vmem %s201, 32 [#allocation6]
        %300 = vst.msk [vmem:[%s299] sm:$0xff] %vm246, %v295
        %301 = vst.msk [vmem:[%s299 + $0x8] sm:$0xff] %vm246, %v296
        %302 = vst.msk [vmem:[%s299 + $0x10] sm:$0xff] %vm246, %v297
        %303 = vst.msk [vmem:[%s299 + $0x18] sm:$0xff] %vm246, %v298
        %s304 = sand.u32 %s79, 1
        %s305 = sand.u32 %s79, 1
        %s306 = smul.addr %s305, 64
        %s307 = scalar_lea.vmem [#allocation6], %s306
        // Predicated region
        $region37: #{laplacian_eigenmaps_loss.1} parent=27 // pred_check
          %p308 = pneg %p89
        $region38: #{laplacian_eigenmaps_loss.1} parent=27 // pred_check_branch
          %310 = sbr.rel (%p308) target = $region40
        $region39: #{laplacian_eigenmaps_loss.1} parent=27 // pred_region
          %s311 = smul.u32 4, %s19
          %s312 = smul.addr %s311, 8
          %s313 = scalar_lea.vmem %s2, %s312
          // Predicated region
          $region41: #{laplacian_eigenmaps_loss.1} parent=39 // pred_check
            _
          $region42: #{laplacian_eigenmaps_loss.1} parent=39 // pred_check_branch
            %315 = sbr.rel (0) target = $region44
          $region43: #{laplacian_eigenmaps_loss.1} parent=39 // pred_region
            // Predicated region
            $region45: #{laplacian_eigenmaps_loss.1} parent=43 // pred_check
              _
            $region46: #{laplacian_eigenmaps_loss.1} parent=43 // pred_check_branch
              %317 = sbr.rel (0) target = $region48
            $region47: #{laplacian_eigenmaps_loss.1} parent=43 // pred_region
              // Predicated region
              $region60: #{laplacian_eigenmaps_loss.1} parent=47 // pred_check
                _
              $region61: #{laplacian_eigenmaps_loss.1} parent=47 // pred_check_branch
                %347 = sbr.rel (0) target = $region63
              $region62: #{laplacian_eigenmaps_loss.1} parent=47 // pred_region
                loop: start=0, step=1, limit=1
                $region64: #{laplacian_eigenmaps_loss.1} parent=62 // loop_pre_header
                  _
                $region65: #{laplacian_eigenmaps_loss.1} parent=62 // loop_header
                  %s349 = sphi 0, %s353
                  %p350 = scmp.ge.s32.totalorder %s349, 1
                  %s354 = sphi %s307, %s307
                  %s355 = sphi %s313, %s313
                $region66: #{laplacian_eigenmaps_loss.1} parent=62 // loop_header_branch
                  %352 = sbr.rel (%p350) target = $region70
                $region67: #{laplacian_eigenmaps_loss.1} parent=62 // loop_body
                  %v356 = vld [vmem:[%s354] sm:$0xff]
                  %357 = vst [vmem:[%s355] sm:$0xff] %v356
                  %v358 = vld [vmem:[%s354 + $0x8] sm:$0xff]
                  %359 = vst [vmem:[%s355 + $0x8] sm:$0xff] %v358
                  %v360 = vld [vmem:[%s354 + $0x10] sm:$0xff]
                  %361 = vst [vmem:[%s355 + $0x10] sm:$0xff] %v360
                  %v362 = vld [vmem:[%s354 + $0x18] sm:$0xff]
                  %363 = vst [vmem:[%s355 + $0x18] sm:$0xff] %v362
                  %v364 = vld [vmem:[%s354 + $0x20] sm:$0xff]
                  %365 = vst [vmem:[%s355 + $0x40] sm:$0xff] %v364
                  %v366 = vld [vmem:[%s354 + $0x28] sm:$0xff]
                  %367 = vst [vmem:[%s355 + $0x48] sm:$0xff] %v366
                  %v368 = vld [vmem:[%s354 + $0x30] sm:$0xff]
                  %369 = vst [vmem:[%s355 + $0x50] sm:$0xff] %v368
                  %v370 = vld [vmem:[%s354 + $0x38] sm:$0xff]
                  %371 = vst [vmem:[%s355 + $0x58] sm:$0xff] %v370
                $region68: #{laplacian_eigenmaps_loss.1} parent=62 // loop_footer
                  %s353 = sadd.s32 1, %s349
                $region69: #{laplacian_eigenmaps_loss.1} parent=62 // loop_footer_branch
                  %348 = sbr.rel target = $region65
                $region70: #{laplacian_eigenmaps_loss.1} parent=62 // loop_exit
                  _
              $region63: #{laplacian_eigenmaps_loss.1} parent=47 // pred_fallthru
                _
              // Predicated region
              $region71: #{laplacian_eigenmaps_loss.1} parent=47 // pred_check
                _
              $region72: #{laplacian_eigenmaps_loss.1} parent=47 // pred_check_branch
                %373 = sbr.rel target = $region74
              $region73: #{laplacian_eigenmaps_loss.1} parent=47 // pred_region
                _
              $region74: #{laplacian_eigenmaps_loss.1} parent=47 // pred_fallthru
                _
            $region48: #{laplacian_eigenmaps_loss.1} parent=43 // pred_fallthru
              _
            // Predicated region
            $region49: #{laplacian_eigenmaps_loss.1} parent=43 // pred_check
              _
            $region50: #{laplacian_eigenmaps_loss.1} parent=43 // pred_check_branch
              %319 = sbr.rel target = $region52
            $region51: #{laplacian_eigenmaps_loss.1} parent=43 // pred_region
              %s321 = ssub.s32 256, 1
              loop: start=0, step=1, limit=1
              $region53: #{laplacian_eigenmaps_loss.1} parent=51 // loop_pre_header
                _
              $region54: #{laplacian_eigenmaps_loss.1} parent=51 // loop_header
                %s323 = sphi 0, %s327
                %p324 = scmp.ge.s32.totalorder %s323, 1
                %s328 = sphi %s307, %s307
                %s329 = sphi %s313, %s313
              $region55: #{laplacian_eigenmaps_loss.1} parent=51 // loop_header_branch
                %326 = sbr.rel (%p324) target = $region59
              $region56: #{laplacian_eigenmaps_loss.1} parent=51 // loop_body
                %v330 = vld [vmem:[%s328] sm:%s321]
                %331 = vst [vmem:[%s329] sm:%s321] %v330
                %v332 = vld [vmem:[%s328 + $0x8] sm:%s321]
                %333 = vst [vmem:[%s329 + $0x8] sm:%s321] %v332
                %v334 = vld [vmem:[%s328 + $0x10] sm:%s321]
                %335 = vst [vmem:[%s329 + $0x10] sm:%s321] %v334
                %v336 = vld [vmem:[%s328 + $0x18] sm:%s321]
                %337 = vst [vmem:[%s329 + $0x18] sm:%s321] %v336
                %v338 = vld [vmem:[%s328 + $0x20] sm:%s321]
                %339 = vst [vmem:[%s329 + $0x40] sm:%s321] %v338
                %v340 = vld [vmem:[%s328 + $0x28] sm:%s321]
                %341 = vst [vmem:[%s329 + $0x48] sm:%s321] %v340
                %v342 = vld [vmem:[%s328 + $0x30] sm:%s321]
                %343 = vst [vmem:[%s329 + $0x50] sm:%s321] %v342
                %v344 = vld [vmem:[%s328 + $0x38] sm:%s321]
                %345 = vst [vmem:[%s329 + $0x58] sm:%s321] %v344
              $region57: #{laplacian_eigenmaps_loss.1} parent=51 // loop_footer
                %s327 = sadd.s32 1, %s323
              $region58: #{laplacian_eigenmaps_loss.1} parent=51 // loop_footer_branch
                %322 = sbr.rel target = $region54
              $region59: #{laplacian_eigenmaps_loss.1} parent=51 // loop_exit
                _
            $region52: #{laplacian_eigenmaps_loss.1} parent=43 // pred_fallthru
              _
          $region44: #{laplacian_eigenmaps_loss.1} parent=39 // pred_fallthru
            _
          %374 = vnop
        $region40: #{laplacian_eigenmaps_loss.1} parent=27 // pred_fallthru
          _
      $region28: #{laplacian_eigenmaps_loss.1} parent=5 // pred_fallthru
        _
      %p375 = scmp.le.s32.totalorder 2, %s14
      // Predicated region
      $region75: #{laplacian_eigenmaps_loss.1} parent=5 // pred_check
        %p376 = pneg %p375
      $region76: #{laplacian_eigenmaps_loss.1} parent=5 // pred_check_branch
        %378 = sbr.rel (%p376) target = $region78
      $region77: #{laplacian_eigenmaps_loss.1} parent=5 // pred_region
        %s379 = ssub.s32 %s14, 2
        // Predicated region
        $region79: #{laplacian_eigenmaps_loss.1} parent=77 // pred_check
          %p380 = pneg %p95
        $region80: #{laplacian_eigenmaps_loss.1} parent=77 // pred_check_branch
          %382 = sbr.rel (%p380) target = $region82
        $region81: #{laplacian_eigenmaps_loss.1} parent=77 // pred_region
          %s383 = sand.u32 %s80, 1
          %s384 = sand.u32 %s80, 1
          %s385 = smul.addr %s384, 64
          %s386 = scalar_lea.vmem [#allocation6], %s385
        $region82: #{laplacian_eigenmaps_loss.1} parent=77 // pred_fallthru
          _
      $region78: #{laplacian_eigenmaps_loss.1} parent=5 // pred_fallthru
        _
    $region6: #{laplacian_eigenmaps_loss.1} parent=1 // loop_footer
      %s18 = sadd.s32 1, %s14
    $region7: #{laplacian_eigenmaps_loss.1} parent=1 // loop_footer_branch
      %13 = sbr.rel target = $region3
    $region8: #{laplacian_eigenmaps_loss.1} parent=1 // loop_exit
      _
    %387 = vsyncpa [#allocation3], 1
    %s388 = scalar_lea.sflag [#allocation3], 1
    %389 = vsyncpa %s388, 1
    %390 = vsyncpa [#allocation5], 1
    %s391 = scalar_lea.sflag [#allocation5], 1
    %392 = vsyncpa %s391, 1

</llo_original>
